<compile_context>
chip_gen: v7x
topology: tpu7x:2x2x1
jax: 0.10.0
libtpu: 0.0.40
codegen_flags: <defaults>
</compile_context>

<pallas_src>
import jax
import jax.numpy as jnp
from jax import lax
from jax.experimental import pallas as pl
from jax.experimental.pallas import tpu as pltpu


def _round_up(x, m):
    return (x + m - 1) // m * m


def _dot_t(a, b):
    """a: (K, M), b: (K, N) -> a^T @ b : (M, N); contraction over axis 0 (MXU)."""
    return lax.dot_general(a, b, (((0,), (0,)), ((), ())),
                           preferred_element_type=jnp.float32)


def _gconv_kernel(idx_ref, edge_ref, node_ref,
                  w1a_ref, b1a_ref, w1b_ref, b1b_ref,
                  w2a_ref, b2a_ref, w2b_ref, b2b_ref,
                  obj_out_ref, pred_out_ref,
                  pooled_acc, counts_acc):
    f32 = jnp.float32
    step = pl.program_id(0)
    last = pl.num_programs(0) - 1

    node = node_ref[...]                      # (O, Din_p)
    edge = edge_ref[...]                      # (tT, Dout_p)
    idx = idx_ref[...]                        # (tT, 2) int32: [:,0]=subj, [:,1]=obj
    O = node.shape[0]
    tT = edge.shape[0]
    H_p = w2a_ref.shape[0]
    Dout_p = edge.shape[1]

    # Gather one-hots (tT, O); also reused (transposed) for the scatter-add.
    iota_to = lax.broadcasted_iota(jnp.int32, (tT, O), 1)
    onehot_s = (iota_to == idx[:, 0:1]).astype(f32)
    onehot_o = (iota_to == idx[:, 1:2]).astype(f32)

    @pl.when(step == 0)
    def _init():
        pooled_acc[...] = jnp.zeros_like(pooled_acc)
        # Reference quirk: counts scattered with edges_indices[:, 0] / [:, 1]
        # -> only the endpoints of the first two *global* triples contribute
        # (those triples live in tile 0 by construction).
        row = lax.broadcasted_iota(jnp.int32, (tT, 1), 0)
        first_two = (row < 2).astype(f32)                       # (tT, 1)
        cnt = _dot_t(onehot_s + onehot_o, first_two)            # (O, 1)
        counts_acc[...] = jnp.maximum(cnt, 1.0)

    # ---- per-triple path --------------------------------------------------
    # Gather subject / object node features on the MXU.
    cur_s = jnp.dot(onehot_s, node, preferred_element_type=f32)   # (tT, Din_p)
    cur_o = jnp.dot(onehot_o, node, preferred_element_type=f32)   # (tT, Din_p)

    # net1 layer 0: ONE fused lane-dense matmul (concat at 128-aligned offsets).
    cur_t = jnp.concatenate([cur_s, edge, cur_o], axis=1)         # (tT, 2*Din_p+Dout_p)
    h = jnp.maximum(
        jnp.dot(cur_t, w1a_ref[...], preferred_element_type=f32) + b1a_ref[...],
        0.0)                                                      # (tT, H_p)

    # net1 layer 1: ONE fused matmul, then 128-aligned column split.
    new_t = jnp.maximum(
        jnp.dot(h, w1b_ref[...], preferred_element_type=f32) + b1b_ref[...],
        0.0)                                                      # (tT, 2*H_p+Dout_p)
    new_s = new_t[:, :H_p]
    new_p = new_t[:, H_p:H_p + Dout_p]
    new_o = new_t[:, H_p + Dout_p:]

    pred_out_ref[...] = new_p

    # Scatter-add pooling onto nodes: reuse gather one-hots, transposed (MXU).
    pooled_acc[...] += _dot_t(onehot_s, new_s) + _dot_t(onehot_o, new_o)

    # ---- finalize (node path) ----------------------------------------------
    @pl.when(step == last)
    def _finalize():
        # avg pooling.  approx=False keeps exact parity with the f32 reference;
        # flip to approx=True to push the reciprocal onto the (idle) EUP slot.
        inv_counts = pl.reciprocal(counts_acc[...], approx=False)  # (O, 1)
        pooled = pooled_acc[...] * inv_counts
        h2 = jnp.maximum(
            jnp.dot(pooled, w2a_ref[...], preferred_element_type=f32) + b2a_ref[...],
            0.0)                                                   # (O, H_p)
        obj_out_ref[...] = jnp.maximum(
            jnp.dot(h2, w2b_ref[...], preferred_element_type=f32) + b2b_ref[...],
            0.0)                                                   # (O, Dout_p)


def init_params(key, din, dout, hidden):
    """Deterministic synthetic init: kaiming-normal weights stored (in, out),
    PyTorch-default uniform biases stored (1, out)."""
    def linear(k, fan_in, fan_out):
        kw, kb = jax.random.split(k)
        w = jax.random.normal(kw, (fan_in, fan_out), jnp.float32) * (2.0 / fan_in) ** 0.5
        bound = 1.0 / (fan_in ** 0.5)
        b = jax.random.uniform(kb, (1, fan_out), jnp.float32, -bound, bound)
        return w, b

    k1, k2, k3, k4 = jax.random.split(key, 4)
    w1a, b1a = linear(k1, 2 * din + dout, hidden)        # net1 layer 0
    w1b, b1b = linear(k2, hidden, 2 * hidden + dout)     # net1 layer 1
    w2a, b2a = linear(k3, hidden, hidden)                # net2 layer 0
    w2b, b2b = linear(k4, hidden, dout)                  # net2 layer 1
    return dict(w1a=w1a, b1a=b1a, w1b=w1b, b1b=b1b,
                w2a=w2a, b2a=b2a, w2b=w2b, b2b=b2b)


def graph_triple_conv(node, edge, idx, params, hidden_dim, tile_t=None):
    O, din = node.shape
    T, dout = edge.shape
    H = hidden_dim
    assert T >= 2, "reference semantics need at least 2 triples"

    din_p = _round_up(din, 128)
    dout_p = _round_up(dout, 128)
    h_p = _round_up(H, 128)

    if tile_t is None:
        tile_t = next((c for c in (512, 256, 128, 64, 32, 16, 8) if T % c == 0), T)
    tile_t = min(tile_t, T)
    assert T % tile_t == 0 and (tile_t % 8 == 0 or tile_t == T) and tile_t >= 2

    # ---- lane-dense padding / weight repacking (one-off wrapper glue) --------
    node_p = jnp.zeros((O, din_p), jnp.float32).at[:, :din].set(node)
    edge_p = jnp.zeros((T, dout_p), jnp.float32).at[:, :dout].set(edge)
    idx_t = idx.astype(jnp.int32).T                                  # (T, 2)

    w1a, b1a = params["w1a"], params["b1a"]
    w1b, b1b = params["w1b"], params["b1b"]

    # net1 layer 0: rows laid out [subject | predicate | object] at padded offsets.
    w1a_p = jnp.zeros((2 * din_p + dout_p, h_p), jnp.float32)
    w1a_p = w1a_p.at[:din, :H].set(w1a[:din])
    w1a_p = w1a_p.at[din_p:din_p + dout, :H].set(w1a[din:din + dout])
    w1a_p = w1a_p.at[din_p + dout_p:din_p + dout_p + din, :H].set(w1a[din + dout:])
    b1a_p = jnp.zeros((1, h_p), jnp.float32).at[:, :H].set(b1a)

    # net1 layer 1: columns laid out [new_s | new_p | new_o] at padded offsets.
    w1b_p = jnp.zeros((h_p, 2 * h_p + dout_p), jnp.float32)
    w1b_p = w1b_p.at[:H, :H].set(w1b[:, :H])
    w1b_p = w1b_p.at[:H, h_p:h_p + dout].set(w1b[:, H:H + dout])
    w1b_p = w1b_p.at[:H, h_p + dout_p:h_p + dout_p + H].set(w1b[:, H + dout:])
    b1b_p = jnp.zeros((1, 2 * h_p + dout_p), jnp.float32)
    b1b_p = b1b_p.at[:, :H].set(b1b[:, :H])
    b1b_p = b1b_p.at[:, h_p:h_p + dout].set(b1b[:, H:H + dout])
    b1b_p = b1b_p.at[:, h_p + dout_p:h_p + dout_p + H].set(b1b[:, H + dout:])

    w2a_p = jnp.zeros((h_p, h_p), jnp.float32).at[:H, :H].set(params["w2a"])
    b2a_p = jnp.zeros((1, h_p), jnp.float32).at[:, :H].set(params["b2a"])
    w2b_p = jnp.zeros((h_p, dout_p), jnp.float32).at[:H, :dout].set(params["w2b"])
    b2b_p = jnp.zeros((1, dout_p), jnp.float32).at[:, :dout].set(params["b2b"])

    inputs = (idx_t, edge_p, node_p,
              w1a_p, b1a_p, w1b_p, b1b_p,
              w2a_p, b2a_p, w2b_p, b2b_p)

    def full_spec(arr):  # VMEM-resident whole array (same block every step)
        return pl.BlockSpec(arr.shape, lambda t: (0, 0))

    in_specs = [
        pl.BlockSpec((tile_t, 2), lambda t: (t, 0)),          # idx_t tile
        pl.BlockSpec((tile_t, dout_p), lambda t: (t, 0)),     # edge tile
        full_spec(node_p),
        full_spec(w1a_p), full_spec(b1a_p), full_spec(w1b_p), full_spec(b1b_p),
        full_spec(w2a_p), full_spec(b2a_p), full_spec(w2b_p), full_spec(b2b_p),
    ]
    out_specs = (
        pl.BlockSpec((O, dout_p), lambda t: (0, 0)),          # obj (finalized at last step)
        pl.BlockSpec((tile_t, dout_p), lambda t: (t, 0)),     # pred tile
    )

    flops = 2 * (2 * T * O * din_p                       # one-hot gathers
                 + T * (2 * din_p + dout_p) * h_p        # net1 layer 0
                 + T * h_p * (2 * h_p + dout_p)          # net1 layer 1
                 + 2 * T * O * h_p                       # scatter-add pooling
                 + O * h_p * h_p + O * h_p * dout_p)     # net2
    bytes_accessed = (sum(int(x.size) * x.dtype.itemsize for x in inputs)
                      + (O + T) * dout_p * 4)

    obj_p, pred_p = pl.pallas_call(
        _gconv_kernel,
        out_shape=(jax.ShapeDtypeStruct((O, dout_p), jnp.float32),
                   jax.ShapeDtypeStruct((T, dout_p), jnp.float32)),
        grid_spec=pltpu.PrefetchScalarGridSpec(
            num_scalar_prefetch=0,
            grid=(T // tile_t,),
            in_specs=in_specs,
            out_specs=out_specs,
            scratch_shapes=[pltpu.VMEM((O, h_p), jnp.float32),   # pooled accumulator
                            pltpu.VMEM((O, 1), jnp.float32)]),   # avg-pool counts
        compiler_params=pltpu.CompilerParams(
            dimension_semantics=("arbitrary",)),
        cost_estimate=pl.CostEstimate(flops=int(flops),
                                      transcendentals=int(O),
                                      bytes_accessed=int(bytes_accessed)),
    )(*inputs)

    return obj_p[:, :dout], pred_p[:, :dout]


def reference_forward(node, edge, idx, params, hidden_dim):
    """Pure-JAX transcription of the PyTorch forward (as written, incl. its quirk)."""
    H = hidden_dim
    O = node.shape[0]
    dout = edge.shape[1]
    cur_s = node[idx[0]]
    cur_o = node[idx[1]]
    cur_t = jnp.concatenate([cur_s, edge, cur_o], axis=1)
    h = jax.nn.relu(cur_t @ params["w1a"] + params["b1a"])
    new_t = jax.nn.relu(h @ params["w1b"] + params["b1b"])
    new_s = new_t[:, :H]
    new_p = new_t[:, H:H + dout]
    new_o = new_t[:, H + dout:2 * H + dout]
    pooled = jnp.zeros((O, H), jnp.float32)
    pooled = pooled.at[idx[0]].add(new_s)
    pooled = pooled.at[idx[1]].add(new_o)
    counts = jnp.zeros((O,), jnp.float32)
    counts = counts.at[idx[:, 0]].add(1.0)   # reference quirk: column indices
    counts = counts.at[idx[:, 1]].add(1.0)
    counts = jnp.maximum(counts, 1.0)
    pooled = pooled / counts[:, None]
    h2 = jax.nn.relu(pooled @ params["w2a"] + params["b2a"])
    obj = jax.nn.relu(h2 @ params["w2b"] + params["b2b"])
    return obj, new_p


if __name__ == "__main__":
    O, T = 16, 16           # objects, triples
    Din, Dout, H = 32, 32, 64

    key = jax.random.PRNGKey(0)
    k_node, k_edge, k_idx, k_param = jax.random.split(key, 4)
    node = jax.random.normal(k_node, (O, Din), jnp.float32)
    edge = jax.random.normal(k_edge, (T, Dout), jnp.float32)
    idx = jax.random.randint(k_idx, (2, T), 0, O, dtype=jnp.int32)
    params = init_params(k_param, Din, Dout, H)

    gconv = jax.jit(graph_triple_conv, static_argnums=(4, 5))
    new_obj, new_pred = gconv(node, edge, idx, params, H, 8)   # tile_t=8 -> grid of 2
    jax.block_until_ready((new_obj, new_pred))

    ref_obj, ref_pred = reference_forward(node, edge, idx, params, H)
    assert new_obj.shape == (O, Dout) and new_pred.shape == (T, Dout)
    assert jnp.allclose(new_obj, ref_obj, atol=1e-4, rtol=1e-4), \
        float(jnp.max(jnp.abs(new_obj - ref_obj)))
    assert jnp.allclose(new_pred, ref_pred, atol=1e-4, rtol=1e-4), \
        float(jnp.max(jnp.abs(new_pred - ref_pred)))

    print("KERNEL_OK")
</pallas_src>

<mosaic_0001>
module attributes {stable_mosaic.version = 11 : i64} {
  func.func @_gconv_kernel(%arg0: i32, %arg1: memref<8x2xi32, #tpu.memory_space<vmem>>, %arg2: memref<8x128xf32, #tpu.memory_space<vmem>>, %arg3: memref<16x128xf32, #tpu.memory_space<vmem>>, %arg4: memref<384x128xf32, #tpu.memory_space<vmem>>, %arg5: memref<1x128xf32, #tpu.memory_space<vmem>>, %arg6: memref<128x384xf32, #tpu.memory_space<vmem>>, %arg7: memref<1x384xf32, #tpu.memory_space<vmem>>, %arg8: memref<128x128xf32, #tpu.memory_space<vmem>>, %arg9: memref<1x128xf32, #tpu.memory_space<vmem>>, %arg10: memref<128x128xf32, #tpu.memory_space<vmem>>, %arg11: memref<1x128xf32, #tpu.memory_space<vmem>>, %arg12: memref<16x128xf32, #tpu.memory_space<vmem>>, %arg13: memref<8x128xf32, #tpu.memory_space<vmem>>, %arg14: memref<16x128xf32, #tpu.memory_space<vmem>>, %arg15: memref<16x1xf32, #tpu.memory_space<vmem>>) attributes {dimension_semantics = [#tpu.dimension_semantics<arbitrary>], iteration_bounds = array<i64: 2>, scalar_prefetch = 0 : i64, scratch_operands = 2 : i64, tpu.core_type = #tpu.core_type<tc>, window_params = [{transform_indices = @transform_0, window_bounds = array<i64: 8, 2>}, {transform_indices = @transform_1, window_bounds = array<i64: 8, 128>}, {pipeline_mode = #tpu.pipeline_mode<synchronous>, transform_indices = @transform_2, window_bounds = array<i64: 16, 128>}, {pipeline_mode = #tpu.pipeline_mode<synchronous>, transform_indices = @transform_3, window_bounds = array<i64: 384, 128>}, {pipeline_mode = #tpu.pipeline_mode<synchronous>, transform_indices = @transform_4, window_bounds = array<i64: 1, 128>}, {pipeline_mode = #tpu.pipeline_mode<synchronous>, transform_indices = @transform_5, window_bounds = array<i64: 128, 384>}, {pipeline_mode = #tpu.pipeline_mode<synchronous>, transform_indices = @transform_6, window_bounds = array<i64: 1, 384>}, {pipeline_mode = #tpu.pipeline_mode<synchronous>, transform_indices = @transform_7, window_bounds = array<i64: 128, 128>}, {pipeline_mode = #tpu.pipeline_mode<synchronous>, transform_indices = @transform_8, window_bounds = array<i64: 1, 128>}, {pipeline_mode = #tpu.pipeline_mode<synchronous>, transform_indices = @transform_9, window_bounds = array<i64: 128, 128>}, {pipeline_mode = #tpu.pipeline_mode<synchronous>, transform_indices = @transform_10, window_bounds = array<i64: 1, 128>}, {pipeline_mode = #tpu.pipeline_mode<synchronous>, transform_indices = @transform_11, window_bounds = array<i64: 16, 128>}, {transform_indices = @transform_12, window_bounds = array<i64: 8, 128>}]} {
    %c0 = arith.constant 0 : index
    %c0_0 = arith.constant 0 : index
    %0 = vector.load %arg3[%c0, %c0_0] : memref<16x128xf32, #tpu.memory_space<vmem>>, vector<16x128xf32>
    %c0_1 = arith.constant 0 : index
    %c0_2 = arith.constant 0 : index
    %1 = vector.load %arg2[%c0_1, %c0_2] : memref<8x128xf32, #tpu.memory_space<vmem>>, vector<8x128xf32>
    %c0_3 = arith.constant 0 : index
    %c0_4 = arith.constant 0 : index
    %2 = vector.load %arg1[%c0_3, %c0_4] : memref<8x2xi32, #tpu.memory_space<vmem>>, vector<8x2xi32>
    %3 = tpu.iota {dimensions = array<i32: 1>} : vector<8x16xi32>
    %4 = vector.extract_strided_slice %2 {offsets = [0, 0], sizes = [8, 1], strides = [1, 1]} : vector<8x2xi32> to vector<8x1xi32>
    %5 = vector.broadcast %4 : vector<8x1xi32> to vector<8x16xi32>
    %6 = arith.cmpi eq, %3, %5 : vector<8x16xi32>
    %7 = arith.extui %6 : vector<8x16xi1> to vector<8x16xi32>
    %8 = arith.sitofp %7 : vector<8x16xi32> to vector<8x16xf32>
    %9 = vector.extract_strided_slice %2 {offsets = [0, 1], sizes = [8, 1], strides = [1, 1]} : vector<8x2xi32> to vector<8x1xi32>
    %10 = vector.broadcast %9 : vector<8x1xi32> to vector<8x16xi32>
    %11 = arith.cmpi eq, %3, %10 : vector<8x16xi32>
    %12 = arith.extui %11 : vector<8x16xi1> to vector<8x16xi32>
    %13 = arith.sitofp %12 : vector<8x16xi32> to vector<8x16xf32>
    %c0_i32 = arith.constant 0 : i32
    %14 = arith.cmpi eq, %arg0, %c0_i32 : i32
    %15 = arith.extui %14 : i1 to i32
    %c0_i32_5 = arith.constant 0 : i32
    %16 = arith.cmpi ne, %15, %c0_i32_5 : i32
    scf.if %16 {
      %cst_28 = arith.constant 0.000000e+00 : f32
      %47 = vector.broadcast %cst_28 : f32 to vector<16x128xf32>
      %c0_29 = arith.constant 0 : index
      %c0_30 = arith.constant 0 : index
      %48 = vector.load %arg14[%c0_29, %c0_30] : memref<16x128xf32, #tpu.memory_space<vmem>>, vector<16x128xf32>
      tpu.vector_store %arg14[%c0_29, %c0_30], %47 {strides = array<i32>} : memref<16x128xf32, #tpu.memory_space<vmem>>, vector<16x128xf32>,
      %49 = tpu.iota {dimensions = array<i32: 0>} : vector<8x1xi32>
      %c2_i32 = arith.constant 2 : i32
      %50 = vector.broadcast %c2_i32 : i32 to vector<8x1xi32>
      %51 = arith.cmpi slt, %49, %50 : vector<8x1xi32>
      %52 = arith.extui %51 : vector<8x1xi1> to vector<8x1xi32>
      %53 = arith.sitofp %52 : vector<8x1xi32> to vector<8x1xf32>
      %54 = arith.addf %8, %13 : vector<8x16xf32>
      %cst_31 = arith.constant dense<0.000000e+00> : vector<16x1xf32>
      %55 = tpu.matmul %54, %53, %cst_31 {dimension_numbers = #tpu.dot_dimension_numbers<[0], [0], [1], [1], [0, 1, 1, 1], [], []>} : vector<8x16xf32>, vector<8x1xf32>, vector<16x1xf32> -> vector<16x1xf32>
      %cst_32 = arith.constant 1.000000e+00 : f32
      %56 = vector.broadcast %cst_32 : f32 to vector<16x1xf32>
      %57 = arith.maximumf %55, %56 : vector<16x1xf32>
      %c0_33 = arith.constant 0 : index
      %c0_34 = arith.constant 0 : index
      %58 = vector.load %arg15[%c0_33, %c0_34] : memref<16x1xf32, #tpu.memory_space<vmem>>, vector<16x1xf32>
      tpu.vector_store %arg15[%c0_33, %c0_34], %57 {strides = array<i32>} : memref<16x1xf32, #tpu.memory_space<vmem>>, vector<16x1xf32>,
    } else {
    }
    %cst = arith.constant dense<0.000000e+00> : vector<8x128xf32>
    %17 = tpu.matmul %8, %0, %cst {dimension_numbers = #tpu.dot_dimension_numbers<[1], [0], [0], [1], [0, 0, 1, 1], [], []>} : vector<8x16xf32>, vector<16x128xf32>, vector<8x128xf32> -> vector<8x128xf32>
    %cst_6 = arith.constant dense<0.000000e+00> : vector<8x128xf32>
    %18 = tpu.matmul %13, %0, %cst_6 {dimension_numbers = #tpu.dot_dimension_numbers<[1], [0], [0], [1], [0, 0, 1, 1], [], []>} : vector<8x16xf32>, vector<16x128xf32>, vector<8x128xf32> -> vector<8x128xf32>
    %19 = tpu.concatenate %17, %1, %18 in 1 : vector<8x128xf32>, vector<8x128xf32>, vector<8x128xf32> -> vector<8x384xf32>
    %c0_7 = arith.constant 0 : index
    %c0_8 = arith.constant 0 : index
    %20 = vector.load %arg4[%c0_7, %c0_8] : memref<384x128xf32, #tpu.memory_space<vmem>>, vector<384x128xf32>
    %cst_9 = arith.constant dense<0.000000e+00> : vector<8x128xf32>
    %21 = tpu.matmul %19, %20, %cst_9 {dimension_numbers = #tpu.dot_dimension_numbers<[1], [0], [0], [1], [0, 0, 1, 1], [], []>} : vector<8x384xf32>, vector<384x128xf32>, vector<8x128xf32> -> vector<8x128xf32>
    %c0_10 = arith.constant 0 : index
    %c0_11 = arith.constant 0 : index
    %22 = vector.load %arg5[%c0_10, %c0_11] : memref<1x128xf32, #tpu.memory_space<vmem>>, vector<1x128xf32>
    %23 = vector.broadcast %22 : vector<1x128xf32> to vector<8x128xf32>
    %24 = arith.addf %21, %23 : vector<8x128xf32>
    %cst_12 = arith.constant 0.000000e+00 : f32
    %25 = vector.broadcast %cst_12 : f32 to vector<8x128xf32>
    %26 = arith.maximumf %24, %25 : vector<8x128xf32>
    %c0_13 = arith.constant 0 : index
    %c0_14 = arith.constant 0 : index
    %27 = vector.load %arg6[%c0_13, %c0_14] : memref<128x384xf32, #tpu.memory_space<vmem>>, vector<128x384xf32>
    %cst_15 = arith.constant dense<0.000000e+00> : vector<8x384xf32>
    %28 = tpu.matmul %26, %27, %cst_15 {dimension_numbers = #tpu.dot_dimension_numbers<[1], [0], [0], [1], [0, 0, 1, 1], [], []>} : vector<8x128xf32>, vector<128x384xf32>, vector<8x384xf32> -> vector<8x384xf32>
    %c0_16 = arith.constant 0 : index
    %c0_17 = arith.constant 0 : index
    %29 = vector.load %arg7[%c0_16, %c0_17] : memref<1x384xf32, #tpu.memory_space<vmem>>, vector<1x384xf32>
    %30 = vector.broadcast %29 : vector<1x384xf32> to vector<8x384xf32>
    %31 = arith.addf %28, %30 : vector<8x384xf32>
    %cst_18 = arith.constant 0.000000e+00 : f32
    %32 = vector.broadcast %cst_18 : f32 to vector<8x384xf32>
    %33 = arith.maximumf %31, %32 : vector<8x384xf32>
    %34 = vector.extract_strided_slice %33 {offsets = [0, 0], sizes = [8, 128], strides = [1, 1]} : vector<8x384xf32> to vector<8x128xf32>
    %35 = vector.extract_strided_slice %33 {offsets = [0, 128], sizes = [8, 128], strides = [1, 1]} : vector<8x384xf32> to vector<8x128xf32>
    %36 = vector.extract_strided_slice %33 {offsets = [0, 256], sizes = [8, 128], strides = [1, 1]} : vector<8x384xf32> to vector<8x128xf32>
    %c0_19 = arith.constant 0 : index
    %c0_20 = arith.constant 0 : index
    %37 = vector.load %arg13[%c0_19, %c0_20] : memref<8x128xf32, #tpu.memory_space<vmem>>, vector<8x128xf32>
    tpu.vector_store %arg13[%c0_19, %c0_20], %35 {strides = array<i32>} : memref<8x128xf32, #tpu.memory_space<vmem>>, vector<8x128xf32>,
    %c0_21 = arith.constant 0 : index
    %c0_22 = arith.constant 0 : index
    %38 = vector.load %arg14[%c0_21, %c0_22] : memref<16x128xf32, #tpu.memory_space<vmem>>, vector<16x128xf32>
    %cst_23 = arith.constant dense<0.000000e+00> : vector<16x128xf32>
    %39 = tpu.matmul %8, %34, %cst_23 {dimension_numbers = #tpu.dot_dimension_numbers<[0], [0], [1], [1], [0, 1, 1, 1], [], []>} : vector<8x16xf32>, vector<8x128xf32>, vector<16x128xf32> -> vector<16x128xf32>
    %cst_24 = arith.constant dense<0.000000e+00> : vector<16x128xf32>
    %40 = tpu.matmul %13, %36, %cst_24 {dimension_numbers = #tpu.dot_dimension_numbers<[0], [0], [1], [1], [0, 1, 1, 1], [], []>} : vector<8x16xf32>, vector<8x128xf32>, vector<16x128xf32> -> vector<16x128xf32>
    %41 = arith.addf %39, %40 : vector<16x128xf32>
    %42 = arith.addf %38, %41 : vector<16x128xf32>
    %c0_25 = arith.constant 0 : index
    %c0_26 = arith.constant 0 : index
    %43 = vector.load %arg14[%c0_25, %c0_26] : memref<16x128xf32, #tpu.memory_space<vmem>>, vector<16x128xf32>
    tpu.vector_store %arg14[%c0_25, %c0_26], %42 {strides = array<i32>} : memref<16x128xf32, #tpu.memory_space<vmem>>, vector<16x128xf32>,
    %c1_i32 = arith.constant 1 : i32
    %44 = arith.cmpi eq, %arg0, %c1_i32 : i32
    %45 = arith.extui %44 : i1 to i32
    %c0_i32_27 = arith.constant 0 : i32
    %46 = arith.cmpi ne, %45, %c0_i32_27 : i32
    scf.if %46 {
      %c0_28 = arith.constant 0 : index
      %c0_29 = arith.constant 0 : index
      %47 = vector.load %arg15[%c0_28, %c0_29] : memref<16x1xf32, #tpu.memory_space<vmem>>, vector<16x1xf32>
      %48 = tpu.reciprocal %47 : vector<16x1xf32> -> vector<16x1xf32>
      %c0_30 = arith.constant 0 : index
      %c0_31 = arith.constant 0 : index
      %49 = vector.load %arg14[%c0_30, %c0_31] : memref<16x128xf32, #tpu.memory_space<vmem>>, vector<16x128xf32>
      %50 = vector.broadcast %48 : vector<16x1xf32> to vector<16x128xf32>
      %51 = arith.mulf %49, %50 : vector<16x128xf32>
      %c0_32 = arith.constant 0 : index
      %c0_33 = arith.constant 0 : index
      %52 = vector.load %arg8[%c0_32, %c0_33] : memref<128x128xf32, #tpu.memory_space<vmem>>, vector<128x128xf32>
      %cst_34 = arith.constant dense<0.000000e+00> : vector<16x128xf32>
      %53 = tpu.matmul %51, %52, %cst_34 {dimension_numbers = #tpu.dot_dimension_numbers<[1], [0], [0], [1], [0, 0, 1, 1], [], []>} : vector<16x128xf32>, vector<128x128xf32>, vector<16x128xf32> -> vector<16x128xf32>
      %c0_35 = arith.constant 0 : index
      %c0_36 = arith.constant 0 : index
      %54 = vector.load %arg9[%c0_35, %c0_36] : memref<1x128xf32, #tpu.memory_space<vmem>>, vector<1x128xf32>
      %55 = vector.broadcast %54 : vector<1x128xf32> to vector<16x128xf32>
      %56 = arith.addf %53, %55 : vector<16x128xf32>
      %cst_37 = arith.constant 0.000000e+00 : f32
      %57 = vector.broadcast %cst_37 : f32 to vector<16x128xf32>
      %58 = arith.maximumf %56, %57 : vector<16x128xf32>
      %c0_38 = arith.constant 0 : index
      %c0_39 = arith.constant 0 : index
      %59 = vector.load %arg10[%c0_38, %c0_39] : memref<128x128xf32, #tpu.memory_space<vmem>>, vector<128x128xf32>
      %cst_40 = arith.constant dense<0.000000e+00> : vector<16x128xf32>
      %60 = tpu.matmul %58, %59, %cst_40 {dimension_numbers = #tpu.dot_dimension_numbers<[1], [0], [0], [1], [0, 0, 1, 1], [], []>} : vector<16x128xf32>, vector<128x128xf32>, vector<16x128xf32> -> vector<16x128xf32>
      %c0_41 = arith.constant 0 : index
      %c0_42 = arith.constant 0 : index
      %61 = vector.load %arg11[%c0_41, %c0_42] : memref<1x128xf32, #tpu.memory_space<vmem>>, vector<1x128xf32>
      %62 = vector.broadcast %61 : vector<1x128xf32> to vector<16x128xf32>
      %63 = arith.addf %60, %62 : vector<16x128xf32>
      %cst_43 = arith.constant 0.000000e+00 : f32
      %64 = vector.broadcast %cst_43 : f32 to vector<16x128xf32>
      %65 = arith.maximumf %63, %64 : vector<16x128xf32>
      %c0_44 = arith.constant 0 : index
      %c0_45 = arith.constant 0 : index
      %66 = vector.load %arg12[%c0_44, %c0_45] : memref<16x128xf32, #tpu.memory_space<vmem>>, vector<16x128xf32>
      tpu.vector_store %arg12[%c0_44, %c0_45], %65 {strides = array<i32>} : memref<16x128xf32, #tpu.memory_space<vmem>>, vector<16x128xf32>,
    } else {
    }
    return
  }
  func.func @transform_0(%arg0: i32) -> (i32, i32) {
    %c0_i32 = arith.constant 0 : i32
    %c0_i32_0 = arith.constant 0 : i32
    return %arg0, %c0_i32 : i32, i32
  }
  func.func @transform_1(%arg0: i32) -> (i32, i32) {
    %c0_i32 = arith.constant 0 : i32
    %c0_i32_0 = arith.constant 0 : i32
    return %arg0, %c0_i32 : i32, i32
  }
  func.func @transform_2(%arg0: i32) -> (i32, i32) {
    %c0_i32 = arith.constant 0 : i32
    %c0_i32_0 = arith.constant 0 : i32
    %c0_i32_1 = arith.constant 0 : i32
    return %c0_i32, %c0_i32_0 : i32, i32
  }
  func.func @transform_3(%arg0: i32) -> (i32, i32) {
    %c0_i32 = arith.constant 0 : i32
    %c0_i32_0 = arith.constant 0 : i32
    %c0_i32_1 = arith.constant 0 : i32
    return %c0_i32, %c0_i32_0 : i32, i32
  }
  func.func @transform_4(%arg0: i32) -> (i32, i32) {
    %c0_i32 = arith.constant 0 : i32
    %c0_i32_0 = arith.constant 0 : i32
    %c0_i32_1 = arith.constant 0 : i32
    return %c0_i32, %c0_i32_0 : i32, i32
  }
  func.func @transform_5(%arg0: i32) -> (i32, i32) {
    %c0_i32 = arith.constant 0 : i32
    %c0_i32_0 = arith.constant 0 : i32
    %c0_i32_1 = arith.constant 0 : i32
    return %c0_i32, %c0_i32_0 : i32, i32
  }
  func.func @transform_6(%arg0: i32) -> (i32, i32) {
    %c0_i32 = arith.constant 0 : i32
    %c0_i32_0 = arith.constant 0 : i32
    %c0_i32_1 = arith.constant 0 : i32
    return %c0_i32, %c0_i32_0 : i32, i32
  }
  func.func @transform_7(%arg0: i32) -> (i32, i32) {
    %c0_i32 = arith.constant 0 : i32
    %c0_i32_0 = arith.constant 0 : i32
    %c0_i32_1 = arith.constant 0 : i32
    return %c0_i32, %c0_i32_0 : i32, i32
  }
  func.func @transform_8(%arg0: i32) -> (i32, i32) {
    %c0_i32 = arith.constant 0 : i32
    %c0_i32_0 = arith.constant 0 : i32
    %c0_i32_1 = arith.constant 0 : i32
    return %c0_i32, %c0_i32_0 : i32, i32
  }
  func.func @transform_9(%arg0: i32) -> (i32, i32) {
    %c0_i32 = arith.constant 0 : i32
    %c0_i32_0 = arith.constant 0 : i32
    %c0_i32_1 = arith.constant 0 : i32
    return %c0_i32, %c0_i32_0 : i32, i32
  }
  func.func @transform_10(%arg0: i32) -> (i32, i32) {
    %c0_i32 = arith.constant 0 : i32
    %c0_i32_0 = arith.constant 0 : i32
    %c0_i32_1 = arith.constant 0 : i32
    return %c0_i32, %c0_i32_0 : i32, i32
  }
  func.func @transform_11(%arg0: i32) -> (i32, i32) {
    %c0_i32 = arith.constant 0 : i32
    %c0_i32_0 = arith.constant 0 : i32
    %c0_i32_1 = arith.constant 0 : i32
    return %c0_i32, %c0_i32_0 : i32, i32
  }
  func.func @transform_12(%arg0: i32) -> (i32, i32) {
    %c0_i32 = arith.constant 0 : i32
    %c0_i32_0 = arith.constant 0 : i32
    return %arg0, %c0_i32 : i32, i32
  }
}

</mosaic_0001>

<llo_original>
// kernel: graph_triple_conv.1
$region0: #{graph_triple_conv.1}
  #allocation0 [shape = 'u32[]', space=smem, size = 0x4, offset = 0x4, fixed_abs, tag = 'smem constant byte address 0x4 - core index']
  #allocation1 [shape = 'u32[144,128]{1,0:T(1,128)}', space=vmem, size = 0x12000, scoped, tag = 'internal scratch']
  #allocation2 [shape = 'f32[16,128]{1,0:T(8,128)}', space=vmem, size = 0x2000, scoped, tag = 'scratch operand']
  #allocation3 [shape = 'f32[16,1]{1,0:T(8,128)}', space=vmem, size = 0x2000, scoped, tag = 'scratch operand']
  %s0 = inlined_call_operand.vmem [shape: s32[16,2], index: 0, kind: input, shape index: {}]
  %s1 = inlined_call_operand.vmem [shape: f32[16,128], index: 1, kind: input, shape index: {}]
  %s2 = inlined_call_operand.vmem [shape: f32[16,128], index: 2, kind: input, shape index: {}]
  %s3 = inlined_call_operand.vmem [shape: f32[384,128], index: 3, kind: input, shape index: {}]
  %s4 = inlined_call_operand.vmem [shape: f32[1,128], index: 4, kind: input, shape index: {}]
  %s5 = inlined_call_operand.vmem [shape: f32[128,384], index: 5, kind: input, shape index: {}]
  %s6 = inlined_call_operand.vmem [shape: f32[1,384], index: 6, kind: input, shape index: {}]
  %s7 = inlined_call_operand.vmem [shape: f32[128,128], index: 7, kind: input, shape index: {}]
  %s8 = inlined_call_operand.vmem [shape: f32[1,128], index: 8, kind: input, shape index: {}]
  %s9 = inlined_call_operand.vmem [shape: f32[128,128], index: 9, kind: input, shape index: {}]
  %s10 = inlined_call_operand.vmem [shape: f32[1,128], index: 10, kind: input, shape index: {}]
  %s11 = inlined_call_operand.hbm [shape: f32[16,128], index: 11, kind: output, shape index: {0}]
  %s12 = inlined_call_operand.hbm [shape: f32[16,128], index: 12, kind: output, shape index: {1}]
  %13 = xla_tuple %s11, %s12
  %s14 = sld [smem:[#allocation0]]
  $region93: #{graph_triple_conv.1} parent=0
    _
  %s16 = ssub.s32 1, %s14
  %s17 = scalar_select 0, %s16, %s14
  $region1: #{graph_triple_conv.1} parent=0
    #allocation4 [shape = 'u8[8192]{0}', space=vmem, size = 0x2000, scoped, tag = 'output window, operand 0, single buffered']
    #allocation5 [shape = 's32[2]{0}', space=sflag, size = 0x8, scoped, tag = 'scoped memory for graph_triple_conv.1']
    #allocation6 [shape = 'u8[8192]{0}', space=vmem, size = 0x2000, scoped, tag = 'output window, operand 1']
    #allocation7 [shape = 's32[2]{0}', space=sflag, size = 0x8, scoped, tag = 'scoped memory for graph_triple_conv.1']
    %18 = vsyncpa [#allocation5], 0
    %19 = vsyncpa [#allocation7], 0
    %s20 = scalar_lea.sflag [#allocation7], 1
    %21 = vsyncpa %s20, 0
    loop: start=0, step=1, limit=4
    $region2: #{graph_triple_conv.1} parent=1 // loop_pre_header
      _
    $region3: #{graph_triple_conv.1} parent=1 // loop_header
      %s23 = sphi 0, %s27
      %p24 = scmp.ge.s32.totalorder %s23, 4
      %s33 = sphi 0, %s35
      %s36 = sphi 0, %s33
      %s37 = sphi 0, %s36
      %s53 = sphi 0, %s37
      %s59 = sphi 0, %s61
      %s62 = sphi 0, %s59
      %s63 = sphi 0, %s62
      %s79 = sphi 0, %s63
      %s83 = sphi 0, %s83
      %s85 = sphi 0, %s83
      %s86 = sphi 0, %s85
      %s100 = sphi 0, %s86
      %s104 = sphi 0, %s104
      %s106 = sphi 0, %s104
      %s107 = sphi 0, %s106
      %s121 = sphi 0, %s107
      %s125 = sphi 0, %s125
      %s127 = sphi 0, %s125
      %s128 = sphi 0, %s127
      %s142 = sphi 0, %s128
      %s146 = sphi 0, %s146
      %s148 = sphi 0, %s146
      %s149 = sphi 0, %s148
      %s163 = sphi 0, %s149
      %s167 = sphi 0, %s167
      %s169 = sphi 0, %s167
      %s170 = sphi 0, %s169
      %s184 = sphi 0, %s170
      %s188 = sphi 0, %s188
      %s190 = sphi 0, %s188
      %s191 = sphi 0, %s190
      %s205 = sphi 0, %s191
      %s209 = sphi 0, %s209
      %s211 = sphi 0, %s209
      %s212 = sphi 0, %s211
      %s226 = sphi 0, %s212
      %s230 = sphi 0, %s230
      %s232 = sphi 0, %s230
      %s233 = sphi 0, %s232
      %s247 = sphi 0, %s233
      %s251 = sphi 0, %s251
      %s253 = sphi 0, %s251
      %s254 = sphi 0, %s253
      %s268 = sphi 0, %s254
      %s272 = sphi 0, %s272
      %s274 = sphi 0, %s272
      %s275 = sphi 0, %s274
      %s289 = sphi 0, %s275
      %s295 = sphi 0, %s297
      %s298 = sphi 0, %s295
      %s299 = sphi 0, %s298
      %s315 = sphi 0, %s299
    $region4: #{graph_triple_conv.1} parent=1 // loop_header_branch
      %26 = sbr.rel (%p24) target = $region8
    $region5: #{graph_triple_conv.1} parent=1 // loop_body
      %s28 = ssub.s32 %s23, 1
      %s29 = ssub.s32 %s23, 2
      %s30 = sadd.s32 %s23, 1
      %s31 = ssub.s32 %s23, %s30
      %p32 = scmp.eq.s32.totalorder %s31, 0
      %s34 = sadd.s32 %s33, 1
      %s35 = scalar_select %p32, %s33, %s34
      %p38 = pneg %p32
      %p39 = scmp.eq.s32.totalorder %s23, 1
      %p40 = por %p38, %p39
      %p41 = scmp.ne.s32.totalorder %s33, %s36
      %p42 = scmp.eq.s32.totalorder %s23, 0
      %p43 = por %p41, %p42
      %p44 = scmp.ne.s32.totalorder %s33, %s36
      %p45 = scmp.eq.s32.totalorder %s28, 1
      %p46 = por %p44, %p45
      %p47 = scmp.ne.s32.totalorder %s36, %s37
      %p48 = scmp.eq.s32.totalorder %s28, 0
      %p49 = por %p47, %p48
      %p50 = scmp.ne.s32.totalorder %s36, %s37
      %p51 = scmp.eq.s32.totalorder %s29, 1
      %p52 = por %p50, %p51
      %p54 = scmp.ne.s32.totalorder %s37, %s53
      %p55 = scmp.eq.s32.totalorder %s29, 0
      %p56 = por %p54, %p55
      %s57 = ssub.s32 %s23, %s30
      %p58 = scmp.eq.s32.totalorder %s57, 0
      %s60 = sadd.s32 %s59, 1
      %s61 = scalar_select %p58, %s59, %s60
      %p64 = pneg %p58
      %p65 = scmp.eq.s32.totalorder %s23, 1
      %p66 = por %p64, %p65
      %p67 = scmp.ne.s32.totalorder %s59, %s62
      %p68 = scmp.eq.s32.totalorder %s23, 0
      %p69 = por %p67, %p68
      %p70 = scmp.ne.s32.totalorder %s59, %s62
      %p71 = scmp.eq.s32.totalorder %s28, 1
      %p72 = por %p70, %p71
      %p73 = scmp.ne.s32.totalorder %s62, %s63
      %p74 = scmp.eq.s32.totalorder %s28, 0
      %p75 = por %p73, %p74
      %p76 = scmp.ne.s32.totalorder %s62, %s63
      %p77 = scmp.eq.s32.totalorder %s29, 1
      %p78 = por %p76, %p77
      %p80 = scmp.ne.s32.totalorder %s63, %s79
      %p81 = scmp.eq.s32.totalorder %s29, 0
      %p82 = por %p80, %p81
      %s84 = sadd.s32 %s83, 1
      %p87 = scmp.eq.s32.totalorder %s23, 1
      %p88 = scmp.ne.s32.totalorder %s83, %s85
      %p89 = scmp.eq.s32.totalorder %s23, 0
      %p90 = por %p88, %p89
      %p91 = scmp.ne.s32.totalorder %s83, %s85
      %p92 = scmp.eq.s32.totalorder %s28, 1
      %p93 = por %p91, %p92
      %p94 = scmp.ne.s32.totalorder %s85, %s86
      %p95 = scmp.eq.s32.totalorder %s28, 0
      %p96 = por %p94, %p95
      %p97 = scmp.ne.s32.totalorder %s85, %s86
      %p98 = scmp.eq.s32.totalorder %s29, 1
      %p99 = por %p97, %p98
      %p101 = scmp.ne.s32.totalorder %s86, %s100
      %p102 = scmp.eq.s32.totalorder %s29, 0
      %p103 = por %p101, %p102
      %s105 = sadd.s32 %s104, 1
      %p108 = scmp.eq.s32.totalorder %s23, 1
      %p109 = scmp.ne.s32.totalorder %s104, %s106
      %p110 = scmp.eq.s32.totalorder %s23, 0
      %p111 = por %p109, %p110
      %p112 = scmp.ne.s32.totalorder %s104, %s106
      %p113 = scmp.eq.s32.totalorder %s28, 1
      %p114 = por %p112, %p113
      %p115 = scmp.ne.s32.totalorder %s106, %s107
      %p116 = scmp.eq.s32.totalorder %s28, 0
      %p117 = por %p115, %p116
      %p118 = scmp.ne.s32.totalorder %s106, %s107
      %p119 = scmp.eq.s32.totalorder %s29, 1
      %p120 = por %p118, %p119
      %p122 = scmp.ne.s32.totalorder %s107, %s121
      %p123 = scmp.eq.s32.totalorder %s29, 0
      %p124 = por %p122, %p123
      %s126 = sadd.s32 %s125, 1
      %p129 = scmp.eq.s32.totalorder %s23, 1
      %p130 = scmp.ne.s32.totalorder %s125, %s127
      %p131 = scmp.eq.s32.totalorder %s23, 0
      %p132 = por %p130, %p131
      %p133 = scmp.ne.s32.totalorder %s125, %s127
      %p134 = scmp.eq.s32.totalorder %s28, 1
      %p135 = por %p133, %p134
      %p136 = scmp.ne.s32.totalorder %s127, %s128
      %p137 = scmp.eq.s32.totalorder %s28, 0
      %p138 = por %p136, %p137
      %p139 = scmp.ne.s32.totalorder %s127, %s128
      %p140 = scmp.eq.s32.totalorder %s29, 1
      %p141 = por %p139, %p140
      %p143 = scmp.ne.s32.totalorder %s128, %s142
      %p144 = scmp.eq.s32.totalorder %s29, 0
      %p145 = por %p143, %p144
      %s147 = sadd.s32 %s146, 1
      %p150 = scmp.eq.s32.totalorder %s23, 1
      %p151 = scmp.ne.s32.totalorder %s146, %s148
      %p152 = scmp.eq.s32.totalorder %s23, 0
      %p153 = por %p151, %p152
      %p154 = scmp.ne.s32.totalorder %s146, %s148
      %p155 = scmp.eq.s32.totalorder %s28, 1
      %p156 = por %p154, %p155
      %p157 = scmp.ne.s32.totalorder %s148, %s149
      %p158 = scmp.eq.s32.totalorder %s28, 0
      %p159 = por %p157, %p158
      %p160 = scmp.ne.s32.totalorder %s148, %s149
      %p161 = scmp.eq.s32.totalorder %s29, 1
      %p162 = por %p160, %p161
      %p164 = scmp.ne.s32.totalorder %s149, %s163
      %p165 = scmp.eq.s32.totalorder %s29, 0
      %p166 = por %p164, %p165
      %s168 = sadd.s32 %s167, 1
      %p171 = scmp.eq.s32.totalorder %s23, 1
      %p172 = scmp.ne.s32.totalorder %s167, %s169
      %p173 = scmp.eq.s32.totalorder %s23, 0
      %p174 = por %p172, %p173
      %p175 = scmp.ne.s32.totalorder %s167, %s169
      %p176 = scmp.eq.s32.totalorder %s28, 1
      %p177 = por %p175, %p176
      %p178 = scmp.ne.s32.totalorder %s169, %s170
      %p179 = scmp.eq.s32.totalorder %s28, 0
      %p180 = por %p178, %p179
      %p181 = scmp.ne.s32.totalorder %s169, %s170
      %p182 = scmp.eq.s32.totalorder %s29, 1
      %p183 = por %p181, %p182
      %p185 = scmp.ne.s32.totalorder %s170, %s184
      %p186 = scmp.eq.s32.totalorder %s29, 0
      %p187 = por %p185, %p186
      %s189 = sadd.s32 %s188, 1
      %p192 = scmp.eq.s32.totalorder %s23, 1
      %p193 = scmp.ne.s32.totalorder %s188, %s190
      %p194 = scmp.eq.s32.totalorder %s23, 0
      %p195 = por %p193, %p194
      %p196 = scmp.ne.s32.totalorder %s188, %s190
      %p197 = scmp.eq.s32.totalorder %s28, 1
      %p198 = por %p196, %p197
      %p199 = scmp.ne.s32.totalorder %s190, %s191
      %p200 = scmp.eq.s32.totalorder %s28, 0
      %p201 = por %p199, %p200
      %p202 = scmp.ne.s32.totalorder %s190, %s191
      %p203 = scmp.eq.s32.totalorder %s29, 1
      %p204 = por %p202, %p203
      %p206 = scmp.ne.s32.totalorder %s191, %s205
      %p207 = scmp.eq.s32.totalorder %s29, 0
      %p208 = por %p206, %p207
      %s210 = sadd.s32 %s209, 1
      %p213 = scmp.eq.s32.totalorder %s23, 1
      %p214 = scmp.ne.s32.totalorder %s209, %s211
      %p215 = scmp.eq.s32.totalorder %s23, 0
      %p216 = por %p214, %p215
      %p217 = scmp.ne.s32.totalorder %s209, %s211
      %p218 = scmp.eq.s32.totalorder %s28, 1
      %p219 = por %p217, %p218
      %p220 = scmp.ne.s32.totalorder %s211, %s212
      %p221 = scmp.eq.s32.totalorder %s28, 0
      %p222 = por %p220, %p221
      %p223 = scmp.ne.s32.totalorder %s211, %s212
      %p224 = scmp.eq.s32.totalorder %s29, 1
      %p225 = por %p223, %p224
      %p227 = scmp.ne.s32.totalorder %s212, %s226
      %p228 = scmp.eq.s32.totalorder %s29, 0
      %p229 = por %p227, %p228
      %s231 = sadd.s32 %s230, 1
      %p234 = scmp.eq.s32.totalorder %s23, 1
      %p235 = scmp.ne.s32.totalorder %s230, %s232
      %p236 = scmp.eq.s32.totalorder %s23, 0
      %p237 = por %p235, %p236
      %p238 = scmp.ne.s32.totalorder %s230, %s232
      %p239 = scmp.eq.s32.totalorder %s28, 1
      %p240 = por %p238, %p239
      %p241 = scmp.ne.s32.totalorder %s232, %s233
      %p242 = scmp.eq.s32.totalorder %s28, 0
      %p243 = por %p241, %p242
      %p244 = scmp.ne.s32.totalorder %s232, %s233
      %p245 = scmp.eq.s32.totalorder %s29, 1
      %p246 = por %p244, %p245
      %p248 = scmp.ne.s32.totalorder %s233, %s247
      %p249 = scmp.eq.s32.totalorder %s29, 0
      %p250 = por %p248, %p249
      %s252 = sadd.s32 %s251, 1
      %p255 = scmp.eq.s32.totalorder %s23, 1
      %p256 = scmp.ne.s32.totalorder %s251, %s253
      %p257 = scmp.eq.s32.totalorder %s23, 0
      %p258 = por %p256, %p257
      %p259 = scmp.ne.s32.totalorder %s251, %s253
      %p260 = scmp.eq.s32.totalorder %s28, 1
      %p261 = por %p259, %p260
      %p262 = scmp.ne.s32.totalorder %s253, %s254
      %p263 = scmp.eq.s32.totalorder %s28, 0
      %p264 = por %p262, %p263
      %p265 = scmp.ne.s32.totalorder %s253, %s254
      %p266 = scmp.eq.s32.totalorder %s29, 1
      %p267 = por %p265, %p266
      %p269 = scmp.ne.s32.totalorder %s254, %s268
      %p270 = scmp.eq.s32.totalorder %s29, 0
      %p271 = por %p269, %p270
      %s273 = sadd.s32 %s272, 1
      %p276 = scmp.eq.s32.totalorder %s23, 1
      %p277 = scmp.ne.s32.totalorder %s272, %s274
      %p278 = scmp.eq.s32.totalorder %s23, 0
      %p279 = por %p277, %p278
      %p280 = scmp.ne.s32.totalorder %s272, %s274
      %p281 = scmp.eq.s32.totalorder %s28, 1
      %p282 = por %p280, %p281
      %p283 = scmp.ne.s32.totalorder %s274, %s275
      %p284 = scmp.eq.s32.totalorder %s28, 0
      %p285 = por %p283, %p284
      %p286 = scmp.ne.s32.totalorder %s274, %s275
      %p287 = scmp.eq.s32.totalorder %s29, 1
      %p288 = por %p286, %p287
      %p290 = scmp.ne.s32.totalorder %s275, %s289
      %p291 = scmp.eq.s32.totalorder %s29, 0
      %p292 = por %p290, %p291
      %s293 = ssub.s32 %s23, %s30
      %p294 = scmp.eq.s32.totalorder %s293, 0
      %s296 = sadd.s32 %s295, 1
      %s297 = scalar_select %p294, %s295, %s296
      %p300 = pneg %p294
      %p301 = scmp.eq.s32.totalorder %s23, 1
      %p302 = por %p300, %p301
      %p303 = scmp.ne.s32.totalorder %s295, %s298
      %p304 = scmp.eq.s32.totalorder %s23, 0
      %p305 = por %p303, %p304
      %p306 = scmp.ne.s32.totalorder %s295, %s298
      %p307 = scmp.eq.s32.totalorder %s28, 1
      %p308 = por %p306, %p307
      %p309 = scmp.ne.s32.totalorder %s298, %s299
      %p310 = scmp.eq.s32.totalorder %s28, 0
      %p311 = por %p309, %p310
      %p312 = scmp.ne.s32.totalorder %s298, %s299
      %p313 = scmp.eq.s32.totalorder %s29, 1
      %p314 = por %p312, %p313
      %p316 = scmp.ne.s32.totalorder %s299, %s315
      %p317 = scmp.eq.s32.totalorder %s29, 0
      %p318 = por %p316, %p317
      %p319 = scmp.le.s32.totalorder 1, %s23
      %p320 = scmp.lt.s32.totalorder %s23, 3
      %p321 = pnand %p319, %p320
      %p322 = pneg %p321
      // Predicated region
      $region9: #{graph_triple_conv.1} parent=5 // pred_check
        _
      $region10: #{graph_triple_conv.1} parent=5 // pred_check_branch
        %324 = sbr.rel (%p321) target = $region12
      $region11: #{graph_triple_conv.1} parent=5 // pred_region
        %s325 = ssub.s32 %s23, 1
        // Predicated region
        $region13: #{graph_triple_conv.1} parent=11 // pred_check
          %p326 = pneg %p96
        $region14: #{graph_triple_conv.1} parent=11 // pred_check_branch
          %328 = sbr.rel (%p326) target = $region16
        $region15: #{graph_triple_conv.1} parent=11 // pred_region
          _
        $region16: #{graph_triple_conv.1} parent=11 // pred_fallthru
          _
        // Predicated region
        $region17: #{graph_triple_conv.1} parent=11 // pred_check
          %p329 = pneg %p117
        $region18: #{graph_triple_conv.1} parent=11 // pred_check_branch
          %331 = sbr.rel (%p329) target = $region20
        $region19: #{graph_triple_conv.1} parent=11 // pred_region
          _
        $region20: #{graph_triple_conv.1} parent=11 // pred_fallthru
          _
        // Predicated region
        $region21: #{graph_triple_conv.1} parent=11 // pred_check
          %p332 = pneg %p138
        $region22: #{graph_triple_conv.1} parent=11 // pred_check_branch
          %334 = sbr.rel (%p332) target = $region24
        $region23: #{graph_triple_conv.1} parent=11 // pred_region
          _
        $region24: #{graph_triple_conv.1} parent=11 // pred_fallthru
          _
        // Predicated region
        $region25: #{graph_triple_conv.1} parent=11 // pred_check
          %p335 = pneg %p159
        $region26: #{graph_triple_conv.1} parent=11 // pred_check_branch
          %337 = sbr.rel (%p335) target = $region28
        $region27: #{graph_triple_conv.1} parent=11 // pred_region
          _
        $region28: #{graph_triple_conv.1} parent=11 // pred_fallthru
          _
        // Predicated region
        $region29: #{graph_triple_conv.1} parent=11 // pred_check
          %p338 = pneg %p180
        $region30: #{graph_triple_conv.1} parent=11 // pred_check_branch
          %340 = sbr.rel (%p338) target = $region32
        $region31: #{graph_triple_conv.1} parent=11 // pred_region
          _
        $region32: #{graph_triple_conv.1} parent=11 // pred_fallthru
          _
        // Predicated region
        $region33: #{graph_triple_conv.1} parent=11 // pred_check
          %p341 = pneg %p201
        $region34: #{graph_triple_conv.1} parent=11 // pred_check_branch
          %343 = sbr.rel (%p341) target = $region36
        $region35: #{graph_triple_conv.1} parent=11 // pred_region
          _
        $region36: #{graph_triple_conv.1} parent=11 // pred_fallthru
          _
        // Predicated region
        $region37: #{graph_triple_conv.1} parent=11 // pred_check
          %p344 = pneg %p222
        $region38: #{graph_triple_conv.1} parent=11 // pred_check_branch
          %346 = sbr.rel (%p344) target = $region40
        $region39: #{graph_triple_conv.1} parent=11 // pred_region
          _
        $region40: #{graph_triple_conv.1} parent=11 // pred_fallthru
          _
        // Predicated region
        $region41: #{graph_triple_conv.1} parent=11 // pred_check
          %p347 = pneg %p243
        $region42: #{graph_triple_conv.1} parent=11 // pred_check_branch
          %349 = sbr.rel (%p347) target = $region44
        $region43: #{graph_triple_conv.1} parent=11 // pred_region
          _
        $region44: #{graph_triple_conv.1} parent=11 // pred_fallthru
          _
        // Predicated region
        $region45: #{graph_triple_conv.1} parent=11 // pred_check
          %p350 = pneg %p264
        $region46: #{graph_triple_conv.1} parent=11 // pred_check_branch
          %352 = sbr.rel (%p350) target = $region48
        $region47: #{graph_triple_conv.1} parent=11 // pred_region
          _
        $region48: #{graph_triple_conv.1} parent=11 // pred_fallthru
          _
      $region12: #{graph_triple_conv.1} parent=5 // pred_fallthru
        _
      %p353 = scmp.lt.s32.totalorder %s23, 2
      // Predicated region
      $region49: #{graph_triple_conv.1} parent=5 // pred_check
        %p354 = pneg %p353
      $region50: #{graph_triple_conv.1} parent=5 // pred_check_branch
        %356 = sbr.rel (%p354) target = $region52
      $region51: #{graph_triple_conv.1} parent=5 // pred_region
        // Predicated region
        $region53: #{graph_triple_conv.1} parent=51 // pred_check
          %p357 = pneg %p43
        $region54: #{graph_triple_conv.1} parent=51 // pred_check_branch
          %359 = sbr.rel (%p357) target = $region56
        $region55: #{graph_triple_conv.1} parent=51 // pred_region
          %p360 = scmp.lt.s32.totalorder %s23, 1
          %s361 = scalar_select %p360, %s23, 1
          %s362 = smul.addr %s361, 8
          %s363 = scalar_lea.vmem %s0, %s362
        $region56: #{graph_triple_conv.1} parent=51 // pred_fallthru
          _
        // Predicated region
        $region57: #{graph_triple_conv.1} parent=51 // pred_check
          %p364 = pneg %p69
        $region58: #{graph_triple_conv.1} parent=51 // pred_check_branch
          %366 = sbr.rel (%p364) target = $region60
        $region59: #{graph_triple_conv.1} parent=51 // pred_region
          %p367 = scmp.lt.s32.totalorder %s23, 1
          %s368 = scalar_select %p367, %s23, 1
          %s369 = smul.addr %s368, 8
          %s370 = scalar_lea.vmem %s1, %s369
        $region60: #{graph_triple_conv.1} parent=51 // pred_fallthru
          _
      $region52: #{graph_triple_conv.1} parent=5 // pred_fallthru
        _
      %p371 = scmp.le.s32.totalorder 1, %s23
      %p372 = scmp.lt.s32.totalorder %s23, 3
      %p373 = pnand %p371, %p372
      %p374 = pneg %p373
      // Predicated region
      $region61: #{graph_triple_conv.1} parent=5 // pred_check
        _
      $region62: #{graph_triple_conv.1} parent=5 // pred_check_branch
        %376 = sbr.rel (%p373) target = $region64
      $region63: #{graph_triple_conv.1} parent=5 // pred_region
        %s377 = ssub.s32 %s23, 1
        %p378 = scmp.lt.s32.totalorder %s28, 1
        %s379 = scalar_select %p378, %s28, 1
        %s380 = smul.addr %s379, 8
        %s381 = scalar_lea.vmem %s0, %s380
        %p382 = pneg %p49
        %p383 = pneg %p46
        %p384 = scmp.lt.s32.totalorder %s28, 1
        %s385 = scalar_select %p384, %s28, 1
        %s386 = smul.addr %s385, 8
        %s387 = scalar_lea.vmem %s1, %s386
        %p388 = pneg %p75
        %p389 = pneg %p72
        %p390 = pneg %p96
        %p391 = pneg %p93
        %p392 = pneg %p117
        %p393 = pneg %p114
        %p394 = pneg %p138
        %p395 = pneg %p135
        %p396 = pneg %p159
        %p397 = pneg %p156
        %p398 = pneg %p180
        %p399 = pneg %p177
        %p400 = pneg %p201
        %p401 = pneg %p198
        %p402 = pneg %p222
        %p403 = pneg %p219
        %p404 = pneg %p243
        %p405 = pneg %p240
        %p406 = pneg %p264
        %p407 = pneg %p261
        %p408 = pneg %p285
        %p409 = pneg %p282
        %p410 = pneg %p311
        %p411 = pneg %p308
        %s412 = sand.u32 %s298, 1
        %s413 = scalar_lea.sflag [#allocation7], %s412
        %s414 = sand.u32 %s298, 1
        %s415 = smul.addr %s414, 8
        %s416 = scalar_lea.vmem [#allocation6], %s415
        %p417 = scmp.lt.s32.totalorder %s28, 1
        %s418 = scalar_select %p417, %s28, 1
        %s419 = smul.addr %s418, 8
        %s420 = scalar_lea.vmem %s0, %s419
        %p421 = scmp.lt.s32.totalorder %s28, 1
        %s422 = scalar_select %p421, %s28, 1
        %s423 = smul.addr %s422, 8
        %s424 = scalar_lea.vmem %s1, %s423
        %v425 = vld [vmem:[%s2] sm:$0xff]
        %v426 = vld [vmem:[%s2 + $0x8] sm:$0xff]
        %v427 = vld [vmem:[%s424] sm:$0xff]
        %v428 = vld [vmem:[%s420] sm:$0xff]
        %v429 = vlaneseq
        %v430 = vand.u32 %v429, 127
        %431 = vset.pattern.permute.xlu0 0
        %432 = vperm.xlu0 %431, %v428
        %v433 = vpop.permute.xlu0 %432
        %vm434 = vcmp.eq.s32.totalorder %v430, %v433
        %v435 = vsel %vm434, 1, 0
        %v436 = vcvt.s32.f32 %v435
        %437 = vset.pattern.permute.xlu0 1
        %438 = vperm.xlu0 %437, %v428
        %v439 = vpop.permute.xlu0 %438
        %vm440 = vcmp.eq.s32.totalorder %v430, %v439
        %v441 = vsel %vm440, 1, 0
        %v442 = vcvt.s32.f32 %v441
        %p443 = scmp.eq.s32.totalorder %s28, 0
        // Predicated region
        $region65: #{graph_triple_conv.1} parent=63 // pred_check
          %p444 = pneg %p443
        $region66: #{graph_triple_conv.1} parent=63 // pred_check_branch
          %446 = sbr.rel (%p444) target = $region68
        $region67: #{graph_triple_conv.1} parent=63 // pred_region
          %447 = vst [vmem:[#allocation2] sm:$0xff] 0.0
          %448 = vst [vmem:[#allocation2 + $0x8] sm:$0xff] 0.0
          %v449 = vlaneseq
          %v450 = vshrl.u32 %v449, 7
          %vm451 = vcmp.lt.s32.totalorder %v450, 2
          %v452 = vsel %vm451, 1, 0
          %v453 = vcvt.s32.f32 %v452
          %v454 = vadd.f32 %v436, %v442
          %455 = vxpose.xlu0.b32.start [1/16] %v454, 128
          %456 = vxpose.xlu0.b32.cont [2/16] 0.0, 128
          %457 = vxpose.xlu0.b32.cont [3/16] 0.0, 128
          %458 = vxpose.xlu0.b32.cont [4/16] 0.0, 128
          %459 = vxpose.xlu0.b32.cont [5/16] 0.0, 128
          %460 = vxpose.xlu0.b32.cont [6/16] 0.0, 128
          %461 = vxpose.xlu0.b32.cont [7/16] 0.0, 128
          %462 = vxpose.xlu0.b32.cont [8/16] 0.0, 128
          %463 = vxpose.xlu0.b32.cont [9/16] 0.0, 128
          %464 = vxpose.xlu0.b32.cont [10/16] 0.0, 128
          %465 = vxpose.xlu0.b32.cont [11/16] 0.0, 128
          %466 = vxpose.xlu0.b32.cont [12/16] 0.0, 128
          %467 = vxpose.xlu0.b32.cont [13/16] 0.0, 128
          %468 = vxpose.xlu0.b32.cont [14/16] 0.0, 128
          %469 = vxpose.xlu0.b32.cont [15/16] 0.0, 128
          %470 = vxpose.xlu0.b32.end [16/16] 0.0, 128
          %v471 = vpop.trf.xlu0
          %v472 = vpop.trf.xlu0
          %v473 = vpop.trf.xlu0
          %v474 = vpop.trf.xlu0
          %v475 = vpop.trf.xlu0
          %v476 = vpop.trf.xlu0
          %v477 = vpop.trf.xlu0
          %v478 = vpop.trf.xlu0
          %v479 = vpop.trf.xlu0
          %v480 = vpop.trf.xlu0
          %v481 = vpop.trf.xlu0
          %v482 = vpop.trf.xlu0
          %v483 = vpop.trf.xlu0
          %v484 = vpop.trf.xlu0
          %v485 = vpop.trf.xlu0
          %v486 = vpop.trf.xlu0
          %vm487 = vcmask 64512
          %v489 = vsel %vm487, %v471, 0
          %v492 = vsel %vm487, %v472, 0
          %494 = vmatprep.subr.mxu0 0.0
          %495 = vmatpush1.msra.mxu0 %v453
          %496 = vmatprep.subr.mxu0 0.0
          %497 = vmatpush1.msra.mxu0 0.0
          %498 = vmatprep.subr.mxu0 0.0
          %499 = vmatpush1.msra.mxu0 0.0
          %500 = vmatprep.subr.mxu0 0.0
          %501 = vmatpush1.msra.mxu0 0.0
          %502 = vmatprep.subr.mxu0 0.0
          %503 = vmatpush1.msra.mxu0 0.0
          %504 = vmatprep.subr.mxu0 0.0
          %505 = vmatpush1.msra.mxu0 0.0
          %506 = vmatprep.subr.mxu0 0.0
          %507 = vmatpush1.msra.mxu0 0.0
          %508 = vmatprep.subr.mxu0 0.0
          %509 = vmatpush1.msra.mxu0 0.0
          %510 = vmatprep.subr.mxu0 0.0
          %511 = vmatpush1.msra.mxu0 0.0
          %512 = vmatprep.subr.mxu0 0.0
          %513 = vmatpush1.msra.mxu0 0.0
          %514 = vmatprep.subr.mxu0 0.0
          %515 = vmatpush1.msra.mxu0 0.0
          %516 = vmatprep.subr.mxu0 0.0
          %517 = vmatpush1.msra.mxu0 0.0
          %518 = vmatprep.subr.mxu0 0.0
          %519 = vmatpush1.msra.mxu0 0.0
          %520 = vmatprep.subr.mxu0 0.0
          %521 = vmatpush1.msra.mxu0 0.0
          %522 = vmatprep.subr.mxu0 0.0
          %523 = vmatpush1.msra.mxu0 0.0
          %524 = vmatprep.subr.mxu0 0.0
          %525 = vmatpush1.msra.mxu0 0.0
          %526 = vmatprep.subr.mxu0 0.0
          %527 = vmatpush1.msra.mxu0 0.0
          %528 = vmatprep.subr.mxu0 0.0
          %529 = vmatpush1.msra.mxu0 0.0
          %530 = vmatprep.subr.mxu0 0.0
          %531 = vmatpush1.msra.mxu0 0.0
          %532 = vmatprep.subr.mxu0 0.0
          %533 = vmatpush1.msra.mxu0 0.0
          %534 = vmatprep.subr.mxu0 0.0
          %535 = vmatpush1.msra.mxu0 0.0
          %536 = vmatprep.subr.mxu0 0.0
          %537 = vmatpush1.msra.mxu0 0.0
          %538 = vmatprep.subr.mxu0 0.0
          %539 = vmatpush1.msra.mxu0 0.0
          %540 = vmatprep.subr.mxu0 0.0
          %541 = vmatpush1.msra.mxu0 0.0
          %542 = vmatprep.subr.mxu0 0.0
          %543 = vmatpush1.msra.mxu0 0.0
          %544 = vmatprep.subr.mxu0 0.0
          %545 = vmatpush1.msra.mxu0 0.0
          %546 = vmatprep.subr.mxu0 0.0
          %547 = vmatpush1.msra.mxu0 0.0
          %548 = vmatprep.subr.mxu0 0.0
          %549 = vmatpush1.msra.mxu0 0.0
          %550 = vmatprep.subr.mxu0 0.0
          %551 = vmatpush1.msra.mxu0 0.0
          %552 = vmatprep.subr.mxu0 0.0
          %553 = vmatpush1.msra.mxu0 0.0
          %554 = vmatprep.subr.mxu0 0.0
          %555 = vmatpush1.msra.mxu0 0.0
          %556 = vmatprep.subr.mxu0 0.0
          %557 = vmatpush1.msra.mxu0 0.0
          %558 = vmatprep.mubr.f32.mxu0 0.0
          %559 = vmatmul.mubr.f32.gmra.mrb[0].mxu0 %v489
          %v560 = vpop.f32.mrb[0].mxu0
          %v561 = vadd.f32 0.0, %v560
          %v562 = vpop.f32.mrb[0].mxu0
          %563 = vmatprep.mubr.f32.mxu0 0.0
          %564 = vmatmul.mubr.f32.gmra.mrb[0].mxu0 %v492
          %v565 = vpop.f32.mrb[0].mxu0
          %v566 = vadd.f32 0.0, %v565
          %v567 = vpop.f32.mrb[0].mxu0
          %568 = vdwg.mxu0
          %v569 = vmax.f32 %v561, 1.0
          %v570 = vmax.f32 %v566, 1.0
          %vm571 = vcmask 7168
          %572 = vst.msk [vmem:[#allocation3] sm:$0xff] %vm571, %v569
          %573 = vst.msk [vmem:[#allocation3 + $0x8] sm:$0xff] %vm571, %v570
        $region68: #{graph_triple_conv.1} parent=63 // pred_fallthru
          _
        %vm574 = vcmask 130048
        %v576 = vsel %vm574, %v436, 0
        %578 = vmatprep.subr.mxu0 0.0
        %579 = vmatpush1.msra.mxu0 %v425
        %580 = vmatprep.subr.mxu0 0.0
        %581 = vmatpush1.msra.mxu0 %v426
        %582 = vmatprep.subr.mxu0 0.0
        %583 = vmatpush1.msra.mxu0 0.0
        %584 = vmatprep.subr.mxu0 0.0
        %585 = vmatpush1.msra.mxu0 0.0
        %586 = vmatprep.subr.mxu0 0.0
        %587 = vmatpush1.msra.mxu0 0.0
        %588 = vmatprep.subr.mxu0 0.0
        %589 = vmatpush1.msra.mxu0 0.0
        %590 = vmatprep.subr.mxu0 0.0
        %591 = vmatpush1.msra.mxu0 0.0
        %592 = vmatprep.subr.mxu0 0.0
        %593 = vmatpush1.msra.mxu0 0.0
        %594 = vmatprep.subr.mxu0 0.0
        %595 = vmatpush1.msra.mxu0 0.0
        %596 = vmatprep.subr.mxu0 0.0
        %597 = vmatpush1.msra.mxu0 0.0
        %598 = vmatprep.subr.mxu0 0.0
        %599 = vmatpush1.msra.mxu0 0.0
        %600 = vmatprep.subr.mxu0 0.0
        %601 = vmatpush1.msra.mxu0 0.0
        %602 = vmatprep.subr.mxu0 0.0
        %603 = vmatpush1.msra.mxu0 0.0
        %604 = vmatprep.subr.mxu0 0.0
        %605 = vmatpush1.msra.mxu0 0.0
        %606 = vmatprep.subr.mxu0 0.0
        %607 = vmatpush1.msra.mxu0 0.0
        %608 = vmatprep.subr.mxu0 0.0
        %609 = vmatpush1.msra.mxu0 0.0
        %610 = vmatprep.subr.mxu0 0.0
        %611 = vmatpush1.msra.mxu0 0.0
        %612 = vmatprep.subr.mxu0 0.0
        %613 = vmatpush1.msra.mxu0 0.0
        %614 = vmatprep.subr.mxu0 0.0
        %615 = vmatpush1.msra.mxu0 0.0
        %616 = vmatprep.subr.mxu0 0.0
        %617 = vmatpush1.msra.mxu0 0.0
        %618 = vmatprep.subr.mxu0 0.0
        %619 = vmatpush1.msra.mxu0 0.0
        %620 = vmatprep.subr.mxu0 0.0
        %621 = vmatpush1.msra.mxu0 0.0
        %622 = vmatprep.subr.mxu0 0.0
        %623 = vmatpush1.msra.mxu0 0.0
        %624 = vmatprep.subr.mxu0 0.0
        %625 = vmatpush1.msra.mxu0 0.0
        %626 = vmatprep.subr.mxu0 0.0
        %627 = vmatpush1.msra.mxu0 0.0
        %628 = vmatprep.subr.mxu0 0.0
        %629 = vmatpush1.msra.mxu0 0.0
        %630 = vmatprep.subr.mxu0 0.0
        %631 = vmatpush1.msra.mxu0 0.0
        %632 = vmatprep.subr.mxu0 0.0
        %633 = vmatpush1.msra.mxu0 0.0
        %634 = vmatprep.subr.mxu0 0.0
        %635 = vmatpush1.msra.mxu0 0.0
        %636 = vmatprep.subr.mxu0 0.0
        %637 = vmatpush1.msra.mxu0 0.0
        %638 = vmatprep.subr.mxu0 0.0
        %639 = vmatpush1.msra.mxu0 0.0
        %640 = vmatprep.subr.mxu0 0.0
        %641 = vmatpush1.msra.mxu0 0.0
        %642 = vmatprep.mubr.f32.mxu0 0.0
        %643 = vmatmul.mubr.f32.gmra.mrb[0].mxu0 %v576
        %v644 = vpop.f32.mrb[0].mxu0
        %v645 = vadd.f32 0.0, %v644
        %v646 = vpop.f32.mrb[0].mxu0
        %647 = vdwg.mxu0
        %v649 = vsel %vm574, %v442, 0
        %651 = vmatprep.subr.mxu0 0.0
        %652 = vmatpush1.msra.mxu0 %v425
        %653 = vmatprep.subr.mxu0 0.0
        %654 = vmatpush1.msra.mxu0 %v426
        %655 = vmatprep.subr.mxu0 0.0
        %656 = vmatpush1.msra.mxu0 0.0
        %657 = vmatprep.subr.mxu0 0.0
        %658 = vmatpush1.msra.mxu0 0.0
        %659 = vmatprep.subr.mxu0 0.0
        %660 = vmatpush1.msra.mxu0 0.0
        %661 = vmatprep.subr.mxu0 0.0
        %662 = vmatpush1.msra.mxu0 0.0
        %663 = vmatprep.subr.mxu0 0.0
        %664 = vmatpush1.msra.mxu0 0.0
        %665 = vmatprep.subr.mxu0 0.0
        %666 = vmatpush1.msra.mxu0 0.0
        %667 = vmatprep.subr.mxu0 0.0
        %668 = vmatpush1.msra.mxu0 0.0
        %669 = vmatprep.subr.mxu0 0.0
        %670 = vmatpush1.msra.mxu0 0.0
        %671 = vmatprep.subr.mxu0 0.0
        %672 = vmatpush1.msra.mxu0 0.0
        %673 = vmatprep.subr.mxu0 0.0
        %674 = vmatpush1.msra.mxu0 0.0
        %675 = vmatprep.subr.mxu0 0.0
        %676 = vmatpush1.msra.mxu0 0.0
        %677 = vmatprep.subr.mxu0 0.0
        %678 = vmatpush1.msra.mxu0 0.0
        %679 = vmatprep.subr.mxu0 0.0
        %680 = vmatpush1.msra.mxu0 0.0
        %681 = vmatprep.subr.mxu0 0.0
        %682 = vmatpush1.msra.mxu0 0.0
        %683 = vmatprep.subr.mxu0 0.0
        %684 = vmatpush1.msra.mxu0 0.0
        %685 = vmatprep.subr.mxu0 0.0
        %686 = vmatpush1.msra.mxu0 0.0
        %687 = vmatprep.subr.mxu0 0.0
        %688 = vmatpush1.msra.mxu0 0.0
        %689 = vmatprep.subr.mxu0 0.0
        %690 = vmatpush1.msra.mxu0 0.0
        %691 = vmatprep.subr.mxu0 0.0
        %692 = vmatpush1.msra.mxu0 0.0
        %693 = vmatprep.subr.mxu0 0.0
        %694 = vmatpush1.msra.mxu0 0.0
        %695 = vmatprep.subr.mxu0 0.0
        %696 = vmatpush1.msra.mxu0 0.0
        %697 = vmatprep.subr.mxu0 0.0
        %698 = vmatpush1.msra.mxu0 0.0
        %699 = vmatprep.subr.mxu0 0.0
        %700 = vmatpush1.msra.mxu0 0.0
        %701 = vmatprep.subr.mxu0 0.0
        %702 = vmatpush1.msra.mxu0 0.0
        %703 = vmatprep.subr.mxu0 0.0
        %704 = vmatpush1.msra.mxu0 0.0
        %705 = vmatprep.subr.mxu0 0.0
        %706 = vmatpush1.msra.mxu0 0.0
        %707 = vmatprep.subr.mxu0 0.0
        %708 = vmatpush1.msra.mxu0 0.0
        %709 = vmatprep.subr.mxu0 0.0
        %710 = vmatpush1.msra.mxu0 0.0
        %711 = vmatprep.subr.mxu0 0.0
        %712 = vmatpush1.msra.mxu0 0.0
        %713 = vmatprep.subr.mxu0 0.0
        %714 = vmatpush1.msra.mxu0 0.0
        %715 = vmatprep.mubr.f32.mxu0 0.0
        %716 = vmatmul.mubr.f32.gmra.mrb[0].mxu0 %v649
        %v717 = vpop.f32.mrb[0].mxu0
        %v718 = vadd.f32 0.0, %v717
        %v719 = vpop.f32.mrb[0].mxu0
        %720 = vdwg.mxu0
        %v721 = vld [vmem:[%s3] sm:$0xff]
        %v722 = vld [vmem:[%s3 + $0x8] sm:$0xff]
        %v723 = vld [vmem:[%s3 + $0x10] sm:$0xff]
        %v724 = vld [vmem:[%s3 + $0x18] sm:$0xff]
        %v725 = vld [vmem:[%s3 + $0x20] sm:$0xff]
        %v726 = vld [vmem:[%s3 + $0x28] sm:$0xff]
        %v727 = vld [vmem:[%s3 + $0x30] sm:$0xff]
        %v728 = vld [vmem:[%s3 + $0x38] sm:$0xff]
        %v729 = vld [vmem:[%s3 + $0x40] sm:$0xff]
        %v730 = vld [vmem:[%s3 + $0x48] sm:$0xff]
        %v731 = vld [vmem:[%s3 + $0x50] sm:$0xff]
        %v732 = vld [vmem:[%s3 + $0x58] sm:$0xff]
        %v733 = vld [vmem:[%s3 + $0x60] sm:$0xff]
        %v734 = vld [vmem:[%s3 + $0x68] sm:$0xff]
        %v735 = vld [vmem:[%s3 + $0x70] sm:$0xff]
        %v736 = vld [vmem:[%s3 + $0x78] sm:$0xff]
        %v737 = vld [vmem:[%s3 + $0x80] sm:$0xff]
        %v738 = vld [vmem:[%s3 + $0x88] sm:$0xff]
        %v739 = vld [vmem:[%s3 + $0x90] sm:$0xff]
        %v740 = vld [vmem:[%s3 + $0x98] sm:$0xff]
        %v741 = vld [vmem:[%s3 + $0xa0] sm:$0xff]
        %v742 = vld [vmem:[%s3 + $0xa8] sm:$0xff]
        %v743 = vld [vmem:[%s3 + $0xb0] sm:$0xff]
        %v744 = vld [vmem:[%s3 + $0xb8] sm:$0xff]
        %v745 = vld [vmem:[%s3 + $0xc0] sm:$0xff]
        %v746 = vld [vmem:[%s3 + $0xc8] sm:$0xff]
        %v747 = vld [vmem:[%s3 + $0xd0] sm:$0xff]
        %v748 = vld [vmem:[%s3 + $0xd8] sm:$0xff]
        %v749 = vld [vmem:[%s3 + $0xe0] sm:$0xff]
        %v750 = vld [vmem:[%s3 + $0xe8] sm:$0xff]
        %v751 = vld [vmem:[%s3 + $0xf0] sm:$0xff]
        %v752 = vld [vmem:[%s3 + $0xf8] sm:$0xff]
        %v753 = vld [vmem:[%s3 + $0x100] sm:$0xff]
        %v754 = vld [vmem:[%s3 + $0x108] sm:$0xff]
        %v755 = vld [vmem:[%s3 + $0x110] sm:$0xff]
        %v756 = vld [vmem:[%s3 + $0x118] sm:$0xff]
        %v757 = vld [vmem:[%s3 + $0x120] sm:$0xff]
        %v758 = vld [vmem:[%s3 + $0x128] sm:$0xff]
        %v759 = vld [vmem:[%s3 + $0x130] sm:$0xff]
        %v760 = vld [vmem:[%s3 + $0x138] sm:$0xff]
        %v761 = vld [vmem:[%s3 + $0x140] sm:$0xff]
        %v762 = vld [vmem:[%s3 + $0x148] sm:$0xff]
        %v763 = vld [vmem:[%s3 + $0x150] sm:$0xff]
        %v764 = vld [vmem:[%s3 + $0x158] sm:$0xff]
        %v765 = vld [vmem:[%s3 + $0x160] sm:$0xff]
        %v766 = vld [vmem:[%s3 + $0x168] sm:$0xff]
        %v767 = vld [vmem:[%s3 + $0x170] sm:$0xff]
        %v768 = vld [vmem:[%s3 + $0x178] sm:$0xff]
        %v769 = vld [vmem:[%s4] sm:$0x1]
        %v771 = vlaneseq
        %v772 = vshrl.u32 %v771, 7
        %v773 = vsub.s32 0, %v772
        %v774 = vrot.slane %v769, %v773
        %776 = vmatprep.subr.mxu0 0.0
        %777 = vmatpush1.msra.mxu0 %v721
        %778 = vmatprep.subr.mxu0 0.0
        %779 = vmatpush1.msra.mxu0 %v722
        %780 = vmatprep.subr.mxu0 0.0
        %781 = vmatpush1.msra.mxu0 %v723
        %782 = vmatprep.subr.mxu0 0.0
        %783 = vmatpush1.msra.mxu0 %v724
        %784 = vmatprep.subr.mxu0 0.0
        %785 = vmatpush1.msra.mxu0 %v725
        %786 = vmatprep.subr.mxu0 0.0
        %787 = vmatpush1.msra.mxu0 %v726
        %788 = vmatprep.subr.mxu0 0.0
        %789 = vmatpush1.msra.mxu0 %v727
        %790 = vmatprep.subr.mxu0 0.0
        %791 = vmatpush1.msra.mxu0 %v728
        %792 = vmatprep.subr.mxu0 0.0
        %793 = vmatpush1.msra.mxu0 %v729
        %794 = vmatprep.subr.mxu0 0.0
        %795 = vmatpush1.msra.mxu0 %v730
        %796 = vmatprep.subr.mxu0 0.0
        %797 = vmatpush1.msra.mxu0 %v731
        %798 = vmatprep.subr.mxu0 0.0
        %799 = vmatpush1.msra.mxu0 %v732
        %800 = vmatprep.subr.mxu0 0.0
        %801 = vmatpush1.msra.mxu0 %v733
        %802 = vmatprep.subr.mxu0 0.0
        %803 = vmatpush1.msra.mxu0 %v734
        %804 = vmatprep.subr.mxu0 0.0
        %805 = vmatpush1.msra.mxu0 %v735
        %806 = vmatprep.subr.mxu0 0.0
        %807 = vmatpush1.msra.mxu0 %v736
        %808 = vmatprep.subr.mxu0 0.0
        %809 = vmatpush1.msra.mxu0 %v737
        %810 = vmatprep.subr.mxu0 0.0
        %811 = vmatpush1.msra.mxu0 %v738
        %812 = vmatprep.subr.mxu0 0.0
        %813 = vmatpush1.msra.mxu0 %v739
        %814 = vmatprep.subr.mxu0 0.0
        %815 = vmatpush1.msra.mxu0 %v740
        %816 = vmatprep.subr.mxu0 0.0
        %817 = vmatpush1.msra.mxu0 %v741
        %818 = vmatprep.subr.mxu0 0.0
        %819 = vmatpush1.msra.mxu0 %v742
        %820 = vmatprep.subr.mxu0 0.0
        %821 = vmatpush1.msra.mxu0 %v743
        %822 = vmatprep.subr.mxu0 0.0
        %823 = vmatpush1.msra.mxu0 %v744
        %824 = vmatprep.subr.mxu0 0.0
        %825 = vmatpush1.msra.mxu0 %v745
        %826 = vmatprep.subr.mxu0 0.0
        %827 = vmatpush1.msra.mxu0 %v746
        %828 = vmatprep.subr.mxu0 0.0
        %829 = vmatpush1.msra.mxu0 %v747
        %830 = vmatprep.subr.mxu0 0.0
        %831 = vmatpush1.msra.mxu0 %v748
        %832 = vmatprep.subr.mxu0 0.0
        %833 = vmatpush1.msra.mxu0 %v749
        %834 = vmatprep.subr.mxu0 0.0
        %835 = vmatpush1.msra.mxu0 %v750
        %836 = vmatprep.subr.mxu0 0.0
        %837 = vmatpush1.msra.mxu0 %v751
        %838 = vmatprep.subr.mxu0 0.0
        %839 = vmatpush1.msra.mxu0 %v752
        %840 = vmatprep.mubr.f32.mxu0 %v427
        %841 = vmatmul.mubr.f32.gmra.mrb[0].mxu0 %v645
        %v842 = vpop.f32.mrb[0].mxu0
        %v843 = vadd.f32 %v774, %v842
        %v844 = vpop.f32.mrb[0].mxu0
        %845 = vdwg.mxu0
        %846 = vmatprep.subr.mxu0 0.0
        %847 = vmatpush1.msra.mxu0 %v753
        %848 = vmatprep.subr.mxu0 0.0
        %849 = vmatpush1.msra.mxu0 %v754
        %850 = vmatprep.subr.mxu0 0.0
        %851 = vmatpush1.msra.mxu0 %v755
        %852 = vmatprep.subr.mxu0 0.0
        %853 = vmatpush1.msra.mxu0 %v756
        %854 = vmatprep.subr.mxu0 0.0
        %855 = vmatpush1.msra.mxu0 %v757
        %856 = vmatprep.subr.mxu0 0.0
        %857 = vmatpush1.msra.mxu0 %v758
        %858 = vmatprep.subr.mxu0 0.0
        %859 = vmatpush1.msra.mxu0 %v759
        %860 = vmatprep.subr.mxu0 0.0
        %861 = vmatpush1.msra.mxu0 %v760
        %862 = vmatprep.subr.mxu0 0.0
        %863 = vmatpush1.msra.mxu0 %v761
        %864 = vmatprep.subr.mxu0 0.0
        %865 = vmatpush1.msra.mxu0 %v762
        %866 = vmatprep.subr.mxu0 0.0
        %867 = vmatpush1.msra.mxu0 %v763
        %868 = vmatprep.subr.mxu0 0.0
        %869 = vmatpush1.msra.mxu0 %v764
        %870 = vmatprep.subr.mxu0 0.0
        %871 = vmatpush1.msra.mxu0 %v765
        %872 = vmatprep.subr.mxu0 0.0
        %873 = vmatpush1.msra.mxu0 %v766
        %874 = vmatprep.subr.mxu0 0.0
        %875 = vmatpush1.msra.mxu0 %v767
        %876 = vmatprep.subr.mxu0 0.0
        %877 = vmatpush1.msra.mxu0 %v768
        %878 = vmatprep.subr.mxu0 0.0
        %879 = vmatpush1.msra.mxu0 0.0
        %880 = vmatprep.subr.mxu0 0.0
        %881 = vmatpush1.msra.mxu0 0.0
        %882 = vmatprep.subr.mxu0 0.0
        %883 = vmatpush1.msra.mxu0 0.0
        %884 = vmatprep.subr.mxu0 0.0
        %885 = vmatpush1.msra.mxu0 0.0
        %886 = vmatprep.subr.mxu0 0.0
        %887 = vmatpush1.msra.mxu0 0.0
        %888 = vmatprep.subr.mxu0 0.0
        %889 = vmatpush1.msra.mxu0 0.0
        %890 = vmatprep.subr.mxu0 0.0
        %891 = vmatpush1.msra.mxu0 0.0
        %892 = vmatprep.subr.mxu0 0.0
        %893 = vmatpush1.msra.mxu0 0.0
        %894 = vmatprep.subr.mxu0 0.0
        %895 = vmatpush1.msra.mxu0 0.0
        %896 = vmatprep.subr.mxu0 0.0
        %897 = vmatpush1.msra.mxu0 0.0
        %898 = vmatprep.subr.mxu0 0.0
        %899 = vmatpush1.msra.mxu0 0.0
        %900 = vmatprep.subr.mxu0 0.0
        %901 = vmatpush1.msra.mxu0 0.0
        %902 = vmatprep.subr.mxu0 0.0
        %903 = vmatpush1.msra.mxu0 0.0
        %904 = vmatprep.subr.mxu0 0.0
        %905 = vmatpush1.msra.mxu0 0.0
        %906 = vmatprep.subr.mxu0 0.0
        %907 = vmatpush1.msra.mxu0 0.0
        %908 = vmatprep.subr.mxu0 0.0
        %909 = vmatpush1.msra.mxu0 0.0
        %910 = vmatprep.mubr.f32.mxu0 0.0
        %911 = vmatmul.mubr.f32.gmra.mrb[0].mxu0 %v718
        %v912 = vpop.f32.mrb[0].mxu0
        %v913 = vadd.f32 %v843, %v912
        %v914 = vpop.f32.mrb[0].mxu0
        %915 = vdwg.mxu0
        %v916 = vmax.f32 %v913, 0.0
        %v917 = vld [vmem:[%s5] sm:$0xff]
        %v918 = vld [vmem:[%s5 + $0x8] sm:$0xff]
        %v919 = vld [vmem:[%s5 + $0x10] sm:$0xff]
        %v920 = vld [vmem:[%s5 + $0x18] sm:$0xff]
        %v921 = vld [vmem:[%s5 + $0x20] sm:$0xff]
        %v922 = vld [vmem:[%s5 + $0x28] sm:$0xff]
        %v923 = vld [vmem:[%s5 + $0x30] sm:$0xff]
        %v924 = vld [vmem:[%s5 + $0x38] sm:$0xff]
        %v925 = vld [vmem:[%s5 + $0x40] sm:$0xff]
        %v926 = vld [vmem:[%s5 + $0x48] sm:$0xff]
        %v927 = vld [vmem:[%s5 + $0x50] sm:$0xff]
        %v928 = vld [vmem:[%s5 + $0x58] sm:$0xff]
        %v929 = vld [vmem:[%s5 + $0x60] sm:$0xff]
        %v930 = vld [vmem:[%s5 + $0x68] sm:$0xff]
        %v931 = vld [vmem:[%s5 + $0x70] sm:$0xff]
        %v932 = vld [vmem:[%s5 + $0x78] sm:$0xff]
        %v933 = vld [vmem:[%s5 + $0x80] sm:$0xff]
        %v934 = vld [vmem:[%s5 + $0x88] sm:$0xff]
        %v935 = vld [vmem:[%s5 + $0x90] sm:$0xff]
        %v936 = vld [vmem:[%s5 + $0x98] sm:$0xff]
        %v937 = vld [vmem:[%s5 + $0xa0] sm:$0xff]
        %v938 = vld [vmem:[%s5 + $0xa8] sm:$0xff]
        %v939 = vld [vmem:[%s5 + $0xb0] sm:$0xff]
        %v940 = vld [vmem:[%s5 + $0xb8] sm:$0xff]
        %v941 = vld [vmem:[%s5 + $0xc0] sm:$0xff]
        %v942 = vld [vmem:[%s5 + $0xc8] sm:$0xff]
        %v943 = vld [vmem:[%s5 + $0xd0] sm:$0xff]
        %v944 = vld [vmem:[%s5 + $0xd8] sm:$0xff]
        %v945 = vld [vmem:[%s5 + $0xe0] sm:$0xff]
        %v946 = vld [vmem:[%s5 + $0xe8] sm:$0xff]
        %v947 = vld [vmem:[%s5 + $0xf0] sm:$0xff]
        %v948 = vld [vmem:[%s5 + $0xf8] sm:$0xff]
        %v949 = vld [vmem:[%s5 + $0x100] sm:$0xff]
        %v950 = vld [vmem:[%s5 + $0x108] sm:$0xff]
        %v951 = vld [vmem:[%s5 + $0x110] sm:$0xff]
        %v952 = vld [vmem:[%s5 + $0x118] sm:$0xff]
        %v953 = vld [vmem:[%s5 + $0x120] sm:$0xff]
        %v954 = vld [vmem:[%s5 + $0x128] sm:$0xff]
        %v955 = vld [vmem:[%s5 + $0x130] sm:$0xff]
        %v956 = vld [vmem:[%s5 + $0x138] sm:$0xff]
        %v957 = vld [vmem:[%s5 + $0x140] sm:$0xff]
        %v958 = vld [vmem:[%s5 + $0x148] sm:$0xff]
        %v959 = vld [vmem:[%s5 + $0x150] sm:$0xff]
        %v960 = vld [vmem:[%s5 + $0x158] sm:$0xff]
        %v961 = vld [vmem:[%s5 + $0x160] sm:$0xff]
        %v962 = vld [vmem:[%s5 + $0x168] sm:$0xff]
        %v963 = vld [vmem:[%s5 + $0x170] sm:$0xff]
        %v964 = vld [vmem:[%s5 + $0x178] sm:$0xff]
        %v965 = vld [vmem:[%s6] sm:$0x7]
        %v967 = vlaneseq
        %v968 = vshrl.u32 %v967, 7
        %v969 = vsub.s32 0, %v968
        %v970 = vrot.slane %v965, %v969
        %v971 = vlaneseq
        %v972 = vshrl.u32 %v971, 7
        %v973 = vsub.s32 1, %v972
        %v974 = vrot.slane %v965, %v973
        %v975 = vlaneseq
        %v976 = vshrl.u32 %v975, 7
        %v977 = vsub.s32 2, %v976
        %v978 = vrot.slane %v965, %v977
        %982 = vmatprep.subr.mxu0 %v918
        %983 = vmatpush1.msra.mxu0 %v917
        %984 = vmatprep.subr.mxu0 %v921
        %985 = vmatpush1.msra.mxu0 %v920
        %986 = vmatprep.subr.mxu0 %v924
        %987 = vmatpush1.msra.mxu0 %v923
        %988 = vmatprep.subr.mxu0 %v927
        %989 = vmatpush1.msra.mxu0 %v926
        %990 = vmatprep.subr.mxu0 %v930
        %991 = vmatpush1.msra.mxu0 %v929
        %992 = vmatprep.subr.mxu0 %v933
        %993 = vmatpush1.msra.mxu0 %v932
        %994 = vmatprep.subr.mxu0 %v936
        %995 = vmatpush1.msra.mxu0 %v935
        %996 = vmatprep.subr.mxu0 %v939
        %997 = vmatpush1.msra.mxu0 %v938
        %998 = vmatprep.subr.mxu0 %v942
        %999 = vmatpush1.msra.mxu0 %v941
        %1000 = vmatprep.subr.mxu0 %v945
        %1001 = vmatpush1.msra.mxu0 %v944
        %1002 = vmatprep.subr.mxu0 %v948
        %1003 = vmatpush1.msra.mxu0 %v947
        %1004 = vmatprep.subr.mxu0 %v951
        %1005 = vmatpush1.msra.mxu0 %v950
        %1006 = vmatprep.subr.mxu0 %v954
        %1007 = vmatpush1.msra.mxu0 %v953
        %1008 = vmatprep.subr.mxu0 %v957
        %1009 = vmatpush1.msra.mxu0 %v956
        %1010 = vmatprep.subr.mxu0 %v960
        %1011 = vmatpush1.msra.mxu0 %v959
        %1012 = vmatprep.subr.mxu0 %v963
        %1013 = vmatpush1.msra.mxu0 %v962
        %1014 = vmatprep.subr.mxu0 0.0
        %1015 = vmatpush1.msra.mxu0 0.0
        %1016 = vmatprep.subr.mxu0 0.0
        %1017 = vmatpush1.msra.mxu0 0.0
        %1018 = vmatprep.subr.mxu0 0.0
        %1019 = vmatpush1.msra.mxu0 0.0
        %1020 = vmatprep.subr.mxu0 0.0
        %1021 = vmatpush1.msra.mxu0 0.0
        %1022 = vmatprep.subr.mxu0 0.0
        %1023 = vmatpush1.msra.mxu0 0.0
        %1024 = vmatprep.subr.mxu0 0.0
        %1025 = vmatpush1.msra.mxu0 0.0
        %1026 = vmatprep.subr.mxu0 0.0
        %1027 = vmatpush1.msra.mxu0 0.0
        %1028 = vmatprep.subr.mxu0 0.0
        %1029 = vmatpush1.msra.mxu0 0.0
        %1030 = vmatprep.subr.mxu0 0.0
        %1031 = vmatpush1.msra.mxu0 0.0
        %1032 = vmatprep.subr.mxu0 0.0
        %1033 = vmatpush1.msra.mxu0 0.0
        %1034 = vmatprep.subr.mxu0 0.0
        %1035 = vmatpush1.msra.mxu0 0.0
        %1036 = vmatprep.subr.mxu0 0.0
        %1037 = vmatpush1.msra.mxu0 0.0
        %1038 = vmatprep.subr.mxu0 0.0
        %1039 = vmatpush1.msra.mxu0 0.0
        %1040 = vmatprep.subr.mxu0 0.0
        %1041 = vmatpush1.msra.mxu0 0.0
        %1042 = vmatprep.subr.mxu0 0.0
        %1043 = vmatpush1.msra.mxu0 0.0
        %1044 = vmatprep.subr.mxu0 0.0
        %1045 = vmatpush1.msra.mxu0 0.0
        %1046 = vmatprep.mubr.f32.mxu0 0.0
        %1047 = vmatmul.mubr.f32.gmra.mrb[0].mxu0 %v916
        %v1048 = vpop.f32.mrb[0].mxu0
        %v1049 = vadd.f32 %v970, %v1048
        %v1050 = vpop.f32.mrb[0].mxu0
        %v1051 = vadd.f32 %v974, %v1050
        %1052 = vdwg.mxu0
        %1053 = vmatprep.subr.mxu0 0.0
        %1054 = vmatpush1.msra.mxu0 %v919
        %1055 = vmatprep.subr.mxu0 0.0
        %1056 = vmatpush1.msra.mxu0 %v922
        %1057 = vmatprep.subr.mxu0 0.0
        %1058 = vmatpush1.msra.mxu0 %v925
        %1059 = vmatprep.subr.mxu0 0.0
        %1060 = vmatpush1.msra.mxu0 %v928
        %1061 = vmatprep.subr.mxu0 0.0
        %1062 = vmatpush1.msra.mxu0 %v931
        %1063 = vmatprep.subr.mxu0 0.0
        %1064 = vmatpush1.msra.mxu0 %v934
        %1065 = vmatprep.subr.mxu0 0.0
        %1066 = vmatpush1.msra.mxu0 %v937
        %1067 = vmatprep.subr.mxu0 0.0
        %1068 = vmatpush1.msra.mxu0 %v940
        %1069 = vmatprep.subr.mxu0 0.0
        %1070 = vmatpush1.msra.mxu0 %v943
        %1071 = vmatprep.subr.mxu0 0.0
        %1072 = vmatpush1.msra.mxu0 %v946
        %1073 = vmatprep.subr.mxu0 0.0
        %1074 = vmatpush1.msra.mxu0 %v949
        %1075 = vmatprep.subr.mxu0 0.0
        %1076 = vmatpush1.msra.mxu0 %v952
        %1077 = vmatprep.subr.mxu0 0.0
        %1078 = vmatpush1.msra.mxu0 %v955
        %1079 = vmatprep.subr.mxu0 0.0
        %1080 = vmatpush1.msra.mxu0 %v958
        %1081 = vmatprep.subr.mxu0 0.0
        %1082 = vmatpush1.msra.mxu0 %v961
        %1083 = vmatprep.subr.mxu0 0.0
        %1084 = vmatpush1.msra.mxu0 %v964
        %1085 = vmatprep.subr.mxu0 0.0
        %1086 = vmatpush1.msra.mxu0 0.0
        %1087 = vmatprep.subr.mxu0 0.0
        %1088 = vmatpush1.msra.mxu0 0.0
        %1089 = vmatprep.subr.mxu0 0.0
        %1090 = vmatpush1.msra.mxu0 0.0
        %1091 = vmatprep.subr.mxu0 0.0
        %1092 = vmatpush1.msra.mxu0 0.0
        %1093 = vmatprep.subr.mxu0 0.0
        %1094 = vmatpush1.msra.mxu0 0.0
        %1095 = vmatprep.subr.mxu0 0.0
        %1096 = vmatpush1.msra.mxu0 0.0
        %1097 = vmatprep.subr.mxu0 0.0
        %1098 = vmatpush1.msra.mxu0 0.0
        %1099 = vmatprep.subr.mxu0 0.0
        %1100 = vmatpush1.msra.mxu0 0.0
        %1101 = vmatprep.subr.mxu0 0.0
        %1102 = vmatpush1.msra.mxu0 0.0
        %1103 = vmatprep.subr.mxu0 0.0
        %1104 = vmatpush1.msra.mxu0 0.0
        %1105 = vmatprep.subr.mxu0 0.0
        %1106 = vmatpush1.msra.mxu0 0.0
        %1107 = vmatprep.subr.mxu0 0.0
        %1108 = vmatpush1.msra.mxu0 0.0
        %1109 = vmatprep.subr.mxu0 0.0
        %1110 = vmatpush1.msra.mxu0 0.0
        %1111 = vmatprep.subr.mxu0 0.0
        %1112 = vmatpush1.msra.mxu0 0.0
        %1113 = vmatprep.subr.mxu0 0.0
        %1114 = vmatpush1.msra.mxu0 0.0
        %1115 = vmatprep.subr.mxu0 0.0
        %1116 = vmatpush1.msra.mxu0 0.0
        %1117 = vmatprep.mubr.f32.mxu0 0.0
        %1118 = vmatmul.mubr.f32.gmra.mrb[0].mxu0 %v916
        %v1119 = vpop.f32.mrb[0].mxu0
        %v1120 = vadd.f32 %v978, %v1119
        %v1121 = vpop.f32.mrb[0].mxu0
        %1122 = vdwg.mxu0
        %v1123 = vmax.f32 %v1049, 0.0
        %v1124 = vmax.f32 %v1051, 0.0
        %v1125 = vmax.f32 %v1120, 0.0
        %1126 = vst [vmem:[%s416] sm:$0xff] %v1124
        %v1127 = vld [vmem:[#allocation2] sm:$0xff]
        %v1128 = vld [vmem:[#allocation2 + $0x8] sm:$0xff]
        %1129 = vxpose.xlu0.b32.start [1/16] %v442, 128
        %1130 = vxpose.xlu0.b32.cont [2/16] 0.0, 128
        %1131 = vxpose.xlu0.b32.cont [3/16] 0.0, 128
        %1132 = vxpose.xlu0.b32.cont [4/16] 0.0, 128
        %1133 = vxpose.xlu0.b32.cont [5/16] 0.0, 128
        %1134 = vxpose.xlu0.b32.cont [6/16] 0.0, 128
        %1135 = vxpose.xlu0.b32.cont [7/16] 0.0, 128
        %1136 = vxpose.xlu0.b32.cont [8/16] 0.0, 128
        %1137 = vxpose.xlu0.b32.cont [9/16] 0.0, 128
        %1138 = vxpose.xlu0.b32.cont [10/16] 0.0, 128
        %1139 = vxpose.xlu0.b32.cont [11/16] 0.0, 128
        %1140 = vxpose.xlu0.b32.cont [12/16] 0.0, 128
        %1141 = vxpose.xlu0.b32.cont [13/16] 0.0, 128
        %1142 = vxpose.xlu0.b32.cont [14/16] 0.0, 128
        %1143 = vxpose.xlu0.b32.cont [15/16] 0.0, 128
        %1144 = vxpose.xlu0.b32.end [16/16] 0.0, 128
        %v1145 = vpop.trf.xlu0
        %v1146 = vpop.trf.xlu0
        %v1147 = vpop.trf.xlu0
        %v1148 = vpop.trf.xlu0
        %v1149 = vpop.trf.xlu0
        %v1150 = vpop.trf.xlu0
        %v1151 = vpop.trf.xlu0
        %v1152 = vpop.trf.xlu0
        %v1153 = vpop.trf.xlu0
        %v1154 = vpop.trf.xlu0
        %v1155 = vpop.trf.xlu0
        %v1156 = vpop.trf.xlu0
        %v1157 = vpop.trf.xlu0
        %v1158 = vpop.trf.xlu0
        %v1159 = vpop.trf.xlu0
        %v1160 = vpop.trf.xlu0
        %vm1161 = vcmask 64512
        %v1163 = vsel %vm1161, %v1145, 0
        %v1166 = vsel %vm1161, %v1146, 0
        %1168 = vmatprep.subr.mxu0 0.0
        %1169 = vmatpush1.msra.mxu0 %v1125
        %1170 = vmatprep.subr.mxu0 0.0
        %1171 = vmatpush1.msra.mxu0 0.0
        %1172 = vmatprep.subr.mxu0 0.0
        %1173 = vmatpush1.msra.mxu0 0.0
        %1174 = vmatprep.subr.mxu0 0.0
        %1175 = vmatpush1.msra.mxu0 0.0
        %1176 = vmatprep.subr.mxu0 0.0
        %1177 = vmatpush1.msra.mxu0 0.0
        %1178 = vmatprep.subr.mxu0 0.0
        %1179 = vmatpush1.msra.mxu0 0.0
        %1180 = vmatprep.subr.mxu0 0.0
        %1181 = vmatpush1.msra.mxu0 0.0
        %1182 = vmatprep.subr.mxu0 0.0
        %1183 = vmatpush1.msra.mxu0 0.0
        %1184 = vmatprep.subr.mxu0 0.0
        %1185 = vmatpush1.msra.mxu0 0.0
        %1186 = vmatprep.subr.mxu0 0.0
        %1187 = vmatpush1.msra.mxu0 0.0
        %1188 = vmatprep.subr.mxu0 0.0
        %1189 = vmatpush1.msra.mxu0 0.0
        %1190 = vmatprep.subr.mxu0 0.0
        %1191 = vmatpush1.msra.mxu0 0.0
        %1192 = vmatprep.subr.mxu0 0.0
        %1193 = vmatpush1.msra.mxu0 0.0
        %1194 = vmatprep.subr.mxu0 0.0
        %1195 = vmatpush1.msra.mxu0 0.0
        %1196 = vmatprep.subr.mxu0 0.0
        %1197 = vmatpush1.msra.mxu0 0.0
        %1198 = vmatprep.subr.mxu0 0.0
        %1199 = vmatpush1.msra.mxu0 0.0
        %1200 = vmatprep.subr.mxu0 0.0
        %1201 = vmatpush1.msra.mxu0 0.0
        %1202 = vmatprep.subr.mxu0 0.0
        %1203 = vmatpush1.msra.mxu0 0.0
        %1204 = vmatprep.subr.mxu0 0.0
        %1205 = vmatpush1.msra.mxu0 0.0
        %1206 = vmatprep.subr.mxu0 0.0
        %1207 = vmatpush1.msra.mxu0 0.0
        %1208 = vmatprep.subr.mxu0 0.0
        %1209 = vmatpush1.msra.mxu0 0.0
        %1210 = vmatprep.subr.mxu0 0.0
        %1211 = vmatpush1.msra.mxu0 0.0
        %1212 = vmatprep.subr.mxu0 0.0
        %1213 = vmatpush1.msra.mxu0 0.0
        %1214 = vmatprep.subr.mxu0 0.0
        %1215 = vmatpush1.msra.mxu0 0.0
        %1216 = vmatprep.subr.mxu0 0.0
        %1217 = vmatpush1.msra.mxu0 0.0
        %1218 = vmatprep.subr.mxu0 0.0
        %1219 = vmatpush1.msra.mxu0 0.0
        %1220 = vmatprep.subr.mxu0 0.0
        %1221 = vmatpush1.msra.mxu0 0.0
        %1222 = vmatprep.subr.mxu0 0.0
        %1223 = vmatpush1.msra.mxu0 0.0
        %1224 = vmatprep.subr.mxu0 0.0
        %1225 = vmatpush1.msra.mxu0 0.0
        %1226 = vmatprep.subr.mxu0 0.0
        %1227 = vmatpush1.msra.mxu0 0.0
        %1228 = vmatprep.subr.mxu0 0.0
        %1229 = vmatpush1.msra.mxu0 0.0
        %1230 = vmatprep.subr.mxu0 0.0
        %1231 = vmatpush1.msra.mxu0 0.0
        %1232 = vmatprep.mubr.f32.mxu0 0.0
        %1233 = vmatmul.mubr.f32.gmra.mrb[0].mxu0 %v1163
        %v1234 = vpop.f32.mrb[0].mxu0
        %v1235 = vadd.f32 0.0, %v1234
        %v1236 = vpop.f32.mrb[0].mxu0
        %1237 = vmatprep.mubr.f32.mxu0 0.0
        %1238 = vmatmul.mubr.f32.gmra.mrb[0].mxu0 %v1166
        %v1239 = vpop.f32.mrb[0].mxu0
        %v1240 = vadd.f32 0.0, %v1239
        %v1241 = vpop.f32.mrb[0].mxu0
        %1242 = vdwg.mxu0
        %1243 = vxpose.xlu0.b32.start [1/16] %v436, 128
        %1244 = vxpose.xlu0.b32.cont [2/16] 0.0, 128
        %1245 = vxpose.xlu0.b32.cont [3/16] 0.0, 128
        %1246 = vxpose.xlu0.b32.cont [4/16] 0.0, 128
        %1247 = vxpose.xlu0.b32.cont [5/16] 0.0, 128
        %1248 = vxpose.xlu0.b32.cont [6/16] 0.0, 128
        %1249 = vxpose.xlu0.b32.cont [7/16] 0.0, 128
        %1250 = vxpose.xlu0.b32.cont [8/16] 0.0, 128
        %1251 = vxpose.xlu0.b32.cont [9/16] 0.0, 128
        %1252 = vxpose.xlu0.b32.cont [10/16] 0.0, 128
        %1253 = vxpose.xlu0.b32.cont [11/16] 0.0, 128
        %1254 = vxpose.xlu0.b32.cont [12/16] 0.0, 128
        %1255 = vxpose.xlu0.b32.cont [13/16] 0.0, 128
        %1256 = vxpose.xlu0.b32.cont [14/16] 0.0, 128
        %1257 = vxpose.xlu0.b32.cont [15/16] 0.0, 128
        %1258 = vxpose.xlu0.b32.end [16/16] 0.0, 128
        %v1259 = vpop.trf.xlu0
        %v1260 = vpop.trf.xlu0
        %v1261 = vpop.trf.xlu0
        %v1262 = vpop.trf.xlu0
        %v1263 = vpop.trf.xlu0
        %v1264 = vpop.trf.xlu0
        %v1265 = vpop.trf.xlu0
        %v1266 = vpop.trf.xlu0
        %v1267 = vpop.trf.xlu0
        %v1268 = vpop.trf.xlu0
        %v1269 = vpop.trf.xlu0
        %v1270 = vpop.trf.xlu0
        %v1271 = vpop.trf.xlu0
        %v1272 = vpop.trf.xlu0
        %v1273 = vpop.trf.xlu0
        %v1274 = vpop.trf.xlu0
        %v1276 = vsel %vm1161, %v1259, 0
        %v1279 = vsel %vm1161, %v1260, 0
        %1281 = vmatprep.subr.mxu0 0.0
        %1282 = vmatpush1.msra.mxu0 %v1123
        %1283 = vmatprep.subr.mxu0 0.0
        %1284 = vmatpush1.msra.mxu0 0.0
        %1285 = vmatprep.subr.mxu0 0.0
        %1286 = vmatpush1.msra.mxu0 0.0
        %1287 = vmatprep.subr.mxu0 0.0
        %1288 = vmatpush1.msra.mxu0 0.0
        %1289 = vmatprep.subr.mxu0 0.0
        %1290 = vmatpush1.msra.mxu0 0.0
        %1291 = vmatprep.subr.mxu0 0.0
        %1292 = vmatpush1.msra.mxu0 0.0
        %1293 = vmatprep.subr.mxu0 0.0
        %1294 = vmatpush1.msra.mxu0 0.0
        %1295 = vmatprep.subr.mxu0 0.0
        %1296 = vmatpush1.msra.mxu0 0.0
        %1297 = vmatprep.subr.mxu0 0.0
        %1298 = vmatpush1.msra.mxu0 0.0
        %1299 = vmatprep.subr.mxu0 0.0
        %1300 = vmatpush1.msra.mxu0 0.0
        %1301 = vmatprep.subr.mxu0 0.0
        %1302 = vmatpush1.msra.mxu0 0.0
        %1303 = vmatprep.subr.mxu0 0.0
        %1304 = vmatpush1.msra.mxu0 0.0
        %1305 = vmatprep.subr.mxu0 0.0
        %1306 = vmatpush1.msra.mxu0 0.0
        %1307 = vmatprep.subr.mxu0 0.0
        %1308 = vmatpush1.msra.mxu0 0.0
        %1309 = vmatprep.subr.mxu0 0.0
        %1310 = vmatpush1.msra.mxu0 0.0
        %1311 = vmatprep.subr.mxu0 0.0
        %1312 = vmatpush1.msra.mxu0 0.0
        %1313 = vmatprep.subr.mxu0 0.0
        %1314 = vmatpush1.msra.mxu0 0.0
        %1315 = vmatprep.subr.mxu0 0.0
        %1316 = vmatpush1.msra.mxu0 0.0
        %1317 = vmatprep.subr.mxu0 0.0
        %1318 = vmatpush1.msra.mxu0 0.0
        %1319 = vmatprep.subr.mxu0 0.0
        %1320 = vmatpush1.msra.mxu0 0.0
        %1321 = vmatprep.subr.mxu0 0.0
        %1322 = vmatpush1.msra.mxu0 0.0
        %1323 = vmatprep.subr.mxu0 0.0
        %1324 = vmatpush1.msra.mxu0 0.0
        %1325 = vmatprep.subr.mxu0 0.0
        %1326 = vmatpush1.msra.mxu0 0.0
        %1327 = vmatprep.subr.mxu0 0.0
        %1328 = vmatpush1.msra.mxu0 0.0
        %1329 = vmatprep.subr.mxu0 0.0
        %1330 = vmatpush1.msra.mxu0 0.0
        %1331 = vmatprep.subr.mxu0 0.0
        %1332 = vmatpush1.msra.mxu0 0.0
        %1333 = vmatprep.subr.mxu0 0.0
        %1334 = vmatpush1.msra.mxu0 0.0
        %1335 = vmatprep.subr.mxu0 0.0
        %1336 = vmatpush1.msra.mxu0 0.0
        %1337 = vmatprep.subr.mxu0 0.0
        %1338 = vmatpush1.msra.mxu0 0.0
        %1339 = vmatprep.subr.mxu0 0.0
        %1340 = vmatpush1.msra.mxu0 0.0
        %1341 = vmatprep.subr.mxu0 0.0
        %1342 = vmatpush1.msra.mxu0 0.0
        %1343 = vmatprep.subr.mxu0 0.0
        %1344 = vmatpush1.msra.mxu0 0.0
        %1345 = vmatprep.mubr.f32.mxu0 0.0
        %1346 = vmatmul.mubr.f32.gmra.mrb[0].mxu0 %v1276
        %v1347 = vpop.f32.mrb[0].mxu0
        %v1348 = vadd.f32 %v1235, %v1347
        %v1349 = vpop.f32.mrb[0].mxu0
        %1350 = vmatprep.mubr.f32.mxu0 0.0
        %1351 = vmatmul.mubr.f32.gmra.mrb[0].mxu0 %v1279
        %v1352 = vpop.f32.mrb[0].mxu0
        %v1353 = vadd.f32 %v1240, %v1352
        %v1354 = vpop.f32.mrb[0].mxu0
        %1355 = vdwg.mxu0
        %v1356 = vadd.f32 %v1127, %v1348
        %v1357 = vadd.f32 %v1128, %v1353
        %1358 = vst [vmem:[#allocation2] sm:$0xff] %v1356
        %1359 = vst [vmem:[#allocation2 + $0x8] sm:$0xff] %v1357
        %p1360 = scmp.eq.s32.totalorder %s28, 1
        // Predicated region
        $region69: #{graph_triple_conv.1} parent=63 // pred_check
          %p1361 = pneg %p1360
        $region70: #{graph_triple_conv.1} parent=63 // pred_check_branch
          %1363 = sbr.rel (%p1361) target = $region72
        $region71: #{graph_triple_conv.1} parent=63 // pred_region
          %v1364 = vld [vmem:[#allocation3] sm:$0xff]
          %v1365 = vld [vmem:[#allocation3 + $0x8] sm:$0xff]
          %v1366 = vrcp.pop %v1364
          %v1367 = vrcp.pop %v1365
          %v1368 = vld [vmem:[#allocation2] sm:$0xff]
          %v1369 = vld [vmem:[#allocation2 + $0x8] sm:$0xff]
          %1371 = vset.pattern.permute.xlu0 0
          %1372 = vperm.xlu0 %1371, %v1366
          %v1373 = vpop.permute.xlu0 %1372
          %1376 = vset.pattern.permute.xlu0 0
          %1377 = vperm.xlu0 %1376, %v1367
          %v1378 = vpop.permute.xlu0 %1377
          %v1380 = vmul.f32 %v1368, %v1373
          %v1381 = vmul.f32 %v1369, %v1378
          %v1382 = vld [vmem:[%s7] sm:$0xff]
          %v1383 = vld [vmem:[%s7 + $0x8] sm:$0xff]
          %v1384 = vld [vmem:[%s7 + $0x10] sm:$0xff]
          %v1385 = vld [vmem:[%s7 + $0x18] sm:$0xff]
          %v1386 = vld [vmem:[%s7 + $0x20] sm:$0xff]
          %v1387 = vld [vmem:[%s7 + $0x28] sm:$0xff]
          %v1388 = vld [vmem:[%s7 + $0x30] sm:$0xff]
          %v1389 = vld [vmem:[%s7 + $0x38] sm:$0xff]
          %v1390 = vld [vmem:[%s7 + $0x40] sm:$0xff]
          %v1391 = vld [vmem:[%s7 + $0x48] sm:$0xff]
          %v1392 = vld [vmem:[%s7 + $0x50] sm:$0xff]
          %v1393 = vld [vmem:[%s7 + $0x58] sm:$0xff]
          %v1394 = vld [vmem:[%s7 + $0x60] sm:$0xff]
          %v1395 = vld [vmem:[%s7 + $0x68] sm:$0xff]
          %v1396 = vld [vmem:[%s7 + $0x70] sm:$0xff]
          %v1397 = vld [vmem:[%s7 + $0x78] sm:$0xff]
          %v1398 = vld [vmem:[%s8] sm:$0x1]
          %v1400 = vlaneseq
          %v1401 = vshrl.u32 %v1400, 7
          %v1402 = vsub.s32 0, %v1401
          %v1403 = vrot.slane %v1398, %v1402
          %1405 = vmatprep.subr.mxu0 0.0
          %1406 = vmatpush1.msra.mxu0 %v1382
          %1407 = vmatprep.subr.mxu0 0.0
          %1408 = vmatpush1.msra.mxu0 %v1383
          %1409 = vmatprep.subr.mxu0 0.0
          %1410 = vmatpush1.msra.mxu0 %v1384
          %1411 = vmatprep.subr.mxu0 0.0
          %1412 = vmatpush1.msra.mxu0 %v1385
          %1413 = vmatprep.subr.mxu0 0.0
          %1414 = vmatpush1.msra.mxu0 %v1386
          %1415 = vmatprep.subr.mxu0 0.0
          %1416 = vmatpush1.msra.mxu0 %v1387
          %1417 = vmatprep.subr.mxu0 0.0
          %1418 = vmatpush1.msra.mxu0 %v1388
          %1419 = vmatprep.subr.mxu0 0.0
          %1420 = vmatpush1.msra.mxu0 %v1389
          %1421 = vmatprep.subr.mxu0 0.0
          %1422 = vmatpush1.msra.mxu0 %v1390
          %1423 = vmatprep.subr.mxu0 0.0
          %1424 = vmatpush1.msra.mxu0 %v1391
          %1425 = vmatprep.subr.mxu0 0.0
          %1426 = vmatpush1.msra.mxu0 %v1392
          %1427 = vmatprep.subr.mxu0 0.0
          %1428 = vmatpush1.msra.mxu0 %v1393
          %1429 = vmatprep.subr.mxu0 0.0
          %1430 = vmatpush1.msra.mxu0 %v1394
          %1431 = vmatprep.subr.mxu0 0.0
          %1432 = vmatpush1.msra.mxu0 %v1395
          %1433 = vmatprep.subr.mxu0 0.0
          %1434 = vmatpush1.msra.mxu0 %v1396
          %1435 = vmatprep.subr.mxu0 0.0
          %1436 = vmatpush1.msra.mxu0 %v1397
          %1437 = vmatprep.subr.mxu0 0.0
          %1438 = vmatpush1.msra.mxu0 0.0
          %1439 = vmatprep.subr.mxu0 0.0
          %1440 = vmatpush1.msra.mxu0 0.0
          %1441 = vmatprep.subr.mxu0 0.0
          %1442 = vmatpush1.msra.mxu0 0.0
          %1443 = vmatprep.subr.mxu0 0.0
          %1444 = vmatpush1.msra.mxu0 0.0
          %1445 = vmatprep.subr.mxu0 0.0
          %1446 = vmatpush1.msra.mxu0 0.0
          %1447 = vmatprep.subr.mxu0 0.0
          %1448 = vmatpush1.msra.mxu0 0.0
          %1449 = vmatprep.subr.mxu0 0.0
          %1450 = vmatpush1.msra.mxu0 0.0
          %1451 = vmatprep.subr.mxu0 0.0
          %1452 = vmatpush1.msra.mxu0 0.0
          %1453 = vmatprep.subr.mxu0 0.0
          %1454 = vmatpush1.msra.mxu0 0.0
          %1455 = vmatprep.subr.mxu0 0.0
          %1456 = vmatpush1.msra.mxu0 0.0
          %1457 = vmatprep.subr.mxu0 0.0
          %1458 = vmatpush1.msra.mxu0 0.0
          %1459 = vmatprep.subr.mxu0 0.0
          %1460 = vmatpush1.msra.mxu0 0.0
          %1461 = vmatprep.subr.mxu0 0.0
          %1462 = vmatpush1.msra.mxu0 0.0
          %1463 = vmatprep.subr.mxu0 0.0
          %1464 = vmatpush1.msra.mxu0 0.0
          %1465 = vmatprep.subr.mxu0 0.0
          %1466 = vmatpush1.msra.mxu0 0.0
          %1467 = vmatprep.subr.mxu0 0.0
          %1468 = vmatpush1.msra.mxu0 0.0
          %1469 = vmatprep.mubr.f32.mxu0 0.0
          %1470 = vmatmul.mubr.f32.gmra.mrb[0].mxu0 %v1380
          %v1471 = vpop.f32.mrb[0].mxu0
          %v1472 = vadd.f32 %v1403, %v1471
          %v1473 = vpop.f32.mrb[0].mxu0
          %1474 = vmatprep.mubr.f32.mxu0 0.0
          %1475 = vmatmul.mubr.f32.gmra.mrb[0].mxu0 %v1381
          %v1476 = vpop.f32.mrb[0].mxu0
          %v1477 = vadd.f32 %v1403, %v1476
          %v1478 = vpop.f32.mrb[0].mxu0
          %1479 = vdwg.mxu0
          %v1480 = vmax.f32 %v1472, 0.0
          %v1481 = vmax.f32 %v1477, 0.0
          %v1482 = vld [vmem:[%s9] sm:$0xff]
          %v1483 = vld [vmem:[%s9 + $0x8] sm:$0xff]
          %v1484 = vld [vmem:[%s9 + $0x10] sm:$0xff]
          %v1485 = vld [vmem:[%s9 + $0x18] sm:$0xff]
          %v1486 = vld [vmem:[%s9 + $0x20] sm:$0xff]
          %v1487 = vld [vmem:[%s9 + $0x28] sm:$0xff]
          %v1488 = vld [vmem:[%s9 + $0x30] sm:$0xff]
          %v1489 = vld [vmem:[%s9 + $0x38] sm:$0xff]
          %v1490 = vld [vmem:[%s9 + $0x40] sm:$0xff]
          %v1491 = vld [vmem:[%s9 + $0x48] sm:$0xff]
          %v1492 = vld [vmem:[%s9 + $0x50] sm:$0xff]
          %v1493 = vld [vmem:[%s9 + $0x58] sm:$0xff]
          %v1494 = vld [vmem:[%s9 + $0x60] sm:$0xff]
          %v1495 = vld [vmem:[%s9 + $0x68] sm:$0xff]
          %v1496 = vld [vmem:[%s9 + $0x70] sm:$0xff]
          %v1497 = vld [vmem:[%s9 + $0x78] sm:$0xff]
          %v1498 = vld [vmem:[%s10] sm:$0x1]
          %v1500 = vlaneseq
          %v1501 = vshrl.u32 %v1500, 7
          %v1502 = vsub.s32 0, %v1501
          %v1503 = vrot.slane %v1498, %v1502
          %1505 = vmatprep.subr.mxu0 0.0
          %1506 = vmatpush1.msra.mxu0 %v1482
          %1507 = vmatprep.subr.mxu0 0.0
          %1508 = vmatpush1.msra.mxu0 %v1483
          %1509 = vmatprep.subr.mxu0 0.0
          %1510 = vmatpush1.msra.mxu0 %v1484
          %1511 = vmatprep.subr.mxu0 0.0
          %1512 = vmatpush1.msra.mxu0 %v1485
          %1513 = vmatprep.subr.mxu0 0.0
          %1514 = vmatpush1.msra.mxu0 %v1486
          %1515 = vmatprep.subr.mxu0 0.0
          %1516 = vmatpush1.msra.mxu0 %v1487
          %1517 = vmatprep.subr.mxu0 0.0
          %1518 = vmatpush1.msra.mxu0 %v1488
          %1519 = vmatprep.subr.mxu0 0.0
          %1520 = vmatpush1.msra.mxu0 %v1489
          %1521 = vmatprep.subr.mxu0 0.0
          %1522 = vmatpush1.msra.mxu0 %v1490
          %1523 = vmatprep.subr.mxu0 0.0
          %1524 = vmatpush1.msra.mxu0 %v1491
          %1525 = vmatprep.subr.mxu0 0.0
          %1526 = vmatpush1.msra.mxu0 %v1492
          %1527 = vmatprep.subr.mxu0 0.0
          %1528 = vmatpush1.msra.mxu0 %v1493
          %1529 = vmatprep.subr.mxu0 0.0
          %1530 = vmatpush1.msra.mxu0 %v1494
          %1531 = vmatprep.subr.mxu0 0.0
          %1532 = vmatpush1.msra.mxu0 %v1495
          %1533 = vmatprep.subr.mxu0 0.0
          %1534 = vmatpush1.msra.mxu0 %v1496
          %1535 = vmatprep.subr.mxu0 0.0
          %1536 = vmatpush1.msra.mxu0 %v1497
          %1537 = vmatprep.subr.mxu0 0.0
          %1538 = vmatpush1.msra.mxu0 0.0
          %1539 = vmatprep.subr.mxu0 0.0
          %1540 = vmatpush1.msra.mxu0 0.0
          %1541 = vmatprep.subr.mxu0 0.0
          %1542 = vmatpush1.msra.mxu0 0.0
          %1543 = vmatprep.subr.mxu0 0.0
          %1544 = vmatpush1.msra.mxu0 0.0
          %1545 = vmatprep.subr.mxu0 0.0
          %1546 = vmatpush1.msra.mxu0 0.0
          %1547 = vmatprep.subr.mxu0 0.0
          %1548 = vmatpush1.msra.mxu0 0.0
          %1549 = vmatprep.subr.mxu0 0.0
          %1550 = vmatpush1.msra.mxu0 0.0
          %1551 = vmatprep.subr.mxu0 0.0
          %1552 = vmatpush1.msra.mxu0 0.0
          %1553 = vmatprep.subr.mxu0 0.0
          %1554 = vmatpush1.msra.mxu0 0.0
          %1555 = vmatprep.subr.mxu0 0.0
          %1556 = vmatpush1.msra.mxu0 0.0
          %1557 = vmatprep.subr.mxu0 0.0
          %1558 = vmatpush1.msra.mxu0 0.0
          %1559 = vmatprep.subr.mxu0 0.0
          %1560 = vmatpush1.msra.mxu0 0.0
          %1561 = vmatprep.subr.mxu0 0.0
          %1562 = vmatpush1.msra.mxu0 0.0
          %1563 = vmatprep.subr.mxu0 0.0
          %1564 = vmatpush1.msra.mxu0 0.0
          %1565 = vmatprep.subr.mxu0 0.0
          %1566 = vmatpush1.msra.mxu0 0.0
          %1567 = vmatprep.subr.mxu0 0.0
          %1568 = vmatpush1.msra.mxu0 0.0
          %1569 = vmatprep.mubr.f32.mxu0 0.0
          %1570 = vmatmul.mubr.f32.gmra.mrb[0].mxu0 %v1480
          %v1571 = vpop.f32.mrb[0].mxu0
          %v1572 = vadd.f32 %v1503, %v1571
          %v1573 = vpop.f32.mrb[0].mxu0
          %1574 = vmatprep.mubr.f32.mxu0 0.0
          %1575 = vmatmul.mubr.f32.gmra.mrb[0].mxu0 %v1481
          %v1576 = vpop.f32.mrb[0].mxu0
          %v1577 = vadd.f32 %v1503, %v1576
          %v1578 = vpop.f32.mrb[0].mxu0
          %1579 = vdwg.mxu0
          %v1580 = vmax.f32 %v1572, 0.0
          %v1581 = vmax.f32 %v1577, 0.0
          %1582 = vst [vmem:[#allocation4] sm:$0xff] %v1580
          %1583 = vst [vmem:[#allocation4 + $0x8] sm:$0xff] %v1581
        $region72: #{graph_triple_conv.1} parent=63 // pred_fallthru
          _
        %s1584 = sand.u32 %s298, 1
        %s1585 = scalar_lea.sflag [#allocation7], %s1584
        %s1586 = sand.u32 %s298, 1
        %s1587 = smul.addr %s1586, 8
        %s1588 = scalar_lea.vmem [#allocation6], %s1587
        // Predicated region
        $region73: #{graph_triple_conv.1} parent=63 // pred_check
          %p1589 = pneg %p282
        $region74: #{graph_triple_conv.1} parent=63 // pred_check_branch
          %1591 = sbr.rel (%p1589) target = $region76
        $region75: #{graph_triple_conv.1} parent=63 // pred_region
          %s1593 = ssub.s32 256, 256
          %1594 = vsyncadd [#allocation5], %s1593
          %s1595 = sshll.u32 [#allocation4], 4
          %s1596 = int_to_ptr.vmem [resolvable:$true] %s1595
          %1601 = dma.vmem_to_hbm [thread:$0]  %s1596, 256, %s11, [#allocation5], 128, 128, 8
        $region76: #{graph_triple_conv.1} parent=63 // pred_fallthru
          _
        // Predicated region
        $region77: #{graph_triple_conv.1} parent=63 // pred_check
          %p1602 = pneg %p308
        $region78: #{graph_triple_conv.1} parent=63 // pred_check_branch
          %1604 = sbr.rel (%p1602) target = $region80
        $region79: #{graph_triple_conv.1} parent=63 // pred_region
          %s1606 = ssub.s32 128, 128
          %1607 = vsyncadd %s1585, %s1606
          %s1608 = smul.addr %s28, 128
          %s1609 = scalar_lea.hbm %s12, %s1608
          %s1611 = sshll.u32 %s1588, 4
          %s1612 = int_to_ptr.vmem [resolvable:$true] %s1611
          %1614 = dma.vmem_to_hbm [thread:$0]  %s1612, 128, %s1609, %s1585
        $region80: #{graph_triple_conv.1} parent=63 // pred_fallthru
          _
        // Predicated region
        $region81: #{graph_triple_conv.1} parent=63 // pred_check
          %p1615 = pneg %p282
        $region82: #{graph_triple_conv.1} parent=63 // pred_check_branch
          %1617 = sbr.rel (%p1615) target = $region84
        $region83: #{graph_triple_conv.1} parent=63 // pred_region
          %1618 = dma.done [#allocation5], 256
        $region84: #{graph_triple_conv.1} parent=63 // pred_fallthru
          _
      $region64: #{graph_triple_conv.1} parent=5 // pred_fallthru
        _
      %p1619 = scmp.le.s32.totalorder 2, %s23
      // Predicated region
      $region85: #{graph_triple_conv.1} parent=5 // pred_check
        %p1620 = pneg %p1619
      $region86: #{graph_triple_conv.1} parent=5 // pred_check_branch
        %1622 = sbr.rel (%p1620) target = $region88
      $region87: #{graph_triple_conv.1} parent=5 // pred_region
        %s1623 = ssub.s32 %s23, 2
        // Predicated region
        $region89: #{graph_triple_conv.1} parent=87 // pred_check
          %p1624 = pneg %p314
        $region90: #{graph_triple_conv.1} parent=87 // pred_check_branch
          %1626 = sbr.rel (%p1624) target = $region92
        $region91: #{graph_triple_conv.1} parent=87 // pred_region
          %s1627 = sand.u32 %s299, 1
          %s1628 = scalar_lea.sflag [#allocation7], %s1627
          %s1629 = sand.u32 %s299, 1
          %s1630 = smul.addr %s1629, 8
          %s1631 = scalar_lea.vmem [#allocation6], %s1630
          %1632 = dma.done %s1628, 128
        $region92: #{graph_triple_conv.1} parent=87 // pred_fallthru
          _
      $region88: #{graph_triple_conv.1} parent=5 // pred_fallthru
        _
    $region6: #{graph_triple_conv.1} parent=1 // loop_footer
      %s27 = sadd.s32 1, %s23
    $region7: #{graph_triple_conv.1} parent=1 // loop_footer_branch
      %22 = sbr.rel target = $region3
    $region8: #{graph_triple_conv.1} parent=1 // loop_exit
      _
    %1633 = vsyncpa [#allocation5], 1
    %s1634 = scalar_lea.sflag [#allocation5], 1
    %1635 = vsyncpa %s1634, 1
    %1636 = vsyncpa [#allocation7], 1
    %s1637 = scalar_lea.sflag [#allocation7], 1
    %1638 = vsyncpa %s1637, 1

</llo_original>
